<compile_context>
chip_gen: v5e
topology: v5e:2x2
jax: 0.10.0
libtpu: 0.0.40
codegen_flags: <defaults>
</compile_context>

<pallas_src>
import jax
import jax.numpy as jnp
import numpy as np
from jax.experimental import pallas as pl
from jax.experimental.pallas import tpu as pltpu


# ------------------------------ Pallas kernels ----------------------------- #
def _gemm_kernel(x_ref, w_ref, o_ref):
    o_ref[...] = jnp.dot(x_ref[...], w_ref[...],
                         preferred_element_type=jnp.float32).astype(o_ref.dtype)


def _gemm_bias_kernel(w_ref, x_ref, b_ref, o_ref):
    acc = jnp.dot(w_ref[...], x_ref[...], preferred_element_type=jnp.float32)
    o_ref[...] = (acc + b_ref[...]).astype(o_ref.dtype)


def gemm_tapstacked(x, w):
    """out = x @ w.  x: (M, K), w: (K, Nw); Nw = 16*Cout (lane-dense).
    No bias/activation here: the transposed-conv tap recombination must happen
    before the bias add + ReLU."""
    M, K = x.shape
    Nw = w.shape[1]
    # Split M in two tiles when it cleanly divides: lets the 'parallel' grid
    # axis engage both v7x TensorCores; tm stays sublane (8) aligned.
    tm = M // 2 if (M >= 64 and M % 16 == 0) else M
    return pl.pallas_call(
        _gemm_kernel,
        out_shape=jax.ShapeDtypeStruct((M, Nw), x.dtype),
        grid=(M // tm,),
        in_specs=[
            pl.BlockSpec((tm, K), lambda i: (i, 0)),   # activation tile
            pl.BlockSpec((K, Nw), lambda i: (0, 0)),   # full tap-stacked weight
        ],
        out_specs=pl.BlockSpec((tm, Nw), lambda i: (i, 0)),
        compiler_params=pltpu.CompilerParams(dimension_semantics=("parallel",)),
    )(x, w)


def gemm_wxT_bias(w2d, xT, b):
    """out = w2d @ xT + b.  w2d: (Co, K), xT: (K, M), b: (Co,) -> (Co, M).
    Channel-major output: the spatial axis (M = N*H*W) is the 128-lane axis,
    so stores are fully unmasked even with Co = 3."""
    Co, K = w2d.shape
    M = xT.shape[1]
    tn = M // 2 if (M >= 256 and M % 256 == 0) else M   # keep lane tiles %128
    return pl.pallas_call(
        _gemm_bias_kernel,
        out_shape=jax.ShapeDtypeStruct((Co, M), xT.dtype),
        grid=(M // tn,),
        in_specs=[
            pl.BlockSpec((Co, K), lambda j: (0, 0)),
            pl.BlockSpec((K, tn), lambda j: (0, j)),
            pl.BlockSpec((Co, 1), lambda j: (0, 0)),
        ],
        out_specs=pl.BlockSpec((Co, tn), lambda j: (0, j)),
        compiler_params=pltpu.CompilerParams(dimension_semantics=("parallel",)),
    )(w2d, xT, b.reshape(Co, 1))


# -------------------- ConvTranspose2d(4, stride=2, pad=1) ------------------ #
# For output row-parity a, out[2p + a] sums x[p + s] * w[..., ki, :] over the
# (kernel-tap ki, input-row shift s) pairs below (same table for columns).
_PARITY_TAPS = {0: ((1, 0), (3, -1)),     # even output rows / cols
                1: ((2, 0), (0, +1))}     # odd  output rows / cols


def conv_transpose2d_4s2p1(x_nhwc, w, b):
    """Exact PyTorch ConvTranspose2d(Cin, Cout, 4, stride=2, padding=1) + ReLU.
    x_nhwc: (N, H, W, Cin); w: (Cin, Cout, 4, 4) [PyTorch layout]; b: (Cout,)."""
    n, h, wd, cin = x_nhwc.shape
    cout = w.shape[1]

    # Tap-stacked weight: column (ki*4 + kj)*Cout + co  <-  w[ci, co, ki, kj].
    wt = jnp.transpose(w, (0, 2, 3, 1)).reshape(cin, 16 * cout)

    # One lane-dense Pallas GEMM for the whole layer.
    y = gemm_tapstacked(x_nhwc.reshape(n * h * wd, cin), wt)
    y = y.reshape(n, h, wd, 4, 4, cout)
    yp = jnp.pad(y, ((0, 0), (1, 1), (1, 1), (0, 0), (0, 0), (0, 0)))

    def parity(a, c):
        acc = None
        for ki, si in _PARITY_TAPS[a]:
            for kj, sj in _PARITY_TAPS[c]:
                t = yp[:, 1 + si:1 + si + h, 1 + sj:1 + sj + wd, ki, kj, :]
                acc = t if acc is None else acc + t
        return acc                                        # (n, h, w, cout)

    out = jnp.stack(
        [jnp.stack([parity(0, 0), parity(0, 1)], axis=3),
         jnp.stack([parity(1, 0), parity(1, 1)], axis=3)],
        axis=2)                                           # (n, h, 2, w, 2, cout)
    out = out.reshape(n, 2 * h, 2 * wd, cout) + b
    return jnp.maximum(out, 0.0)                          # ReLU (all CT layers)


# ---------------------------------- Decoder -------------------------------- #
@jax.jit
def decoder_forward(x_nchw, params):
    x = jnp.transpose(x_nchw, (0, 2, 3, 1))               # NCHW -> NHWC
    for (w, b) in params["ct"]:
        x = conv_transpose2d_4s2p1(x, w, b)               # CT(4,2,1) + ReLU
    w1, b1 = params["conv1x1"]                            # (out_ch, ch, 1, 1)
    n, h, wd, c = x.shape
    out_ch = w1.shape[0]
    xT = x.reshape(n * h * wd, c).T                       # (C, N*H*W)
    o = gemm_wxT_bias(w1.reshape(out_ch, c), xT, b1)      # (out_ch, N*H*W)
    return jnp.transpose(o.reshape(out_ch, n, h, wd), (1, 0, 2, 3))  # NCHW


# ------------------------- pure-JAX reference (check) ----------------------- #
def _ref_decoder(x, params):
    def ct(x, w, b):
        wr = jnp.flip(w, axis=(2, 3)).transpose(1, 0, 2, 3)   # (cout, cin, 4, 4)
        y = jax.lax.conv_general_dilated(
            x, wr, window_strides=(1, 1), padding=((2, 2), (2, 2)),
            lhs_dilation=(2, 2),
            dimension_numbers=("NCHW", "OIHW", "NCHW"))
        return y + b[None, :, None, None]

    for (w, b) in params["ct"]:
        x = jax.nn.relu(ct(x, w, b))
    w1, b1 = params["conv1x1"]
    y = jax.lax.conv_general_dilated(
        x, w1, (1, 1), "VALID", dimension_numbers=("NCHW", "OIHW", "NCHW"))
    return y + b1[None, :, None, None]


# ------------------------------------ main ---------------------------------- #
if __name__ == "__main__":
    batch, embed_dim, channel, out_channel = 2, 8, 16, 3
    h = w = 4

    key = jax.random.PRNGKey(0)
    ks = jax.random.split(key, 9)

    def init(k, shape, scale=0.1):
        return jax.random.normal(k, shape, jnp.float32) * scale

    params = {
        "ct": [
            (init(ks[0], (embed_dim, channel, 4, 4)), init(ks[1], (channel,))),
            (init(ks[2], (channel, channel, 4, 4)), init(ks[3], (channel,))),
            (init(ks[4], (channel, channel, 4, 4)), init(ks[5], (channel,))),
        ],
        "conv1x1": (init(ks[6], (out_channel, channel, 1, 1)),
                    init(ks[7], (out_channel,))),
    }
    x = jax.random.normal(ks[8], (batch, embed_dim, h, w), jnp.float32)

    out = jax.block_until_ready(decoder_forward(x, params))
    assert out.shape == (batch, out_channel, 8 * h, 8 * w), out.shape

    ref = jax.block_until_ready(_ref_decoder(x, params))
    np.testing.assert_allclose(np.asarray(out), np.asarray(ref),
                               rtol=2e-4, atol=2e-4)
    print("KERNEL_OK")
</pallas_src>

<mosaic_0001>
module attributes {stable_mosaic.version = 11 : i64} {
  func.func @_gemm_kernel(%arg0: i32, %arg1: memref<32x8xf32, #tpu.memory_space<vmem>>, %arg2: memref<8x256xf32, #tpu.memory_space<vmem>>, %arg3: memref<32x256xf32, #tpu.memory_space<vmem>>) attributes {dimension_semantics = [#tpu.dimension_semantics<parallel>], iteration_bounds = array<i64: 1>, scalar_prefetch = 0 : i64, scratch_operands = 0 : i64, tpu.core_type = #tpu.core_type<tc>, window_params = [{transform_indices = @transform_0, window_bounds = array<i64: 32, 8>}, {pipeline_mode = #tpu.pipeline_mode<synchronous>, transform_indices = @transform_1, window_bounds = array<i64: 8, 256>}, {transform_indices = @transform_2, window_bounds = array<i64: 32, 256>}]} {
    %c0 = arith.constant 0 : index
    %c0_0 = arith.constant 0 : index
    %0 = vector.load %arg1[%c0, %c0_0] : memref<32x8xf32, #tpu.memory_space<vmem>>, vector<32x8xf32>
    %c0_1 = arith.constant 0 : index
    %c0_2 = arith.constant 0 : index
    %1 = vector.load %arg2[%c0_1, %c0_2] : memref<8x256xf32, #tpu.memory_space<vmem>>, vector<8x256xf32>
    %cst = arith.constant dense<0.000000e+00> : vector<32x256xf32>
    %2 = tpu.matmul %0, %1, %cst {dimension_numbers = #tpu.dot_dimension_numbers<[1], [0], [0], [1], [0, 0, 1, 1], [], []>} : vector<32x8xf32>, vector<8x256xf32>, vector<32x256xf32> -> vector<32x256xf32>
    %c0_3 = arith.constant 0 : index
    %c0_4 = arith.constant 0 : index
    %3 = vector.load %arg3[%c0_3, %c0_4] : memref<32x256xf32, #tpu.memory_space<vmem>>, vector<32x256xf32>
    tpu.vector_store %arg3[%c0_3, %c0_4], %2 {strides = array<i32>} : memref<32x256xf32, #tpu.memory_space<vmem>>, vector<32x256xf32>,
    return
  }
  func.func @transform_0(%arg0: i32) -> (i32, i32) {
    %c0_i32 = arith.constant 0 : i32
    %c0_i32_0 = arith.constant 0 : i32
    return %arg0, %c0_i32 : i32, i32
  }
  func.func @transform_1(%arg0: i32) -> (i32, i32) {
    %c0_i32 = arith.constant 0 : i32
    %c0_i32_0 = arith.constant 0 : i32
    %c0_i32_1 = arith.constant 0 : i32
    return %c0_i32, %c0_i32_0 : i32, i32
  }
  func.func @transform_2(%arg0: i32) -> (i32, i32) {
    %c0_i32 = arith.constant 0 : i32
    %c0_i32_0 = arith.constant 0 : i32
    return %arg0, %c0_i32 : i32, i32
  }
}

module attributes {stable_mosaic.version = 11 : i64} {
  func.func @_gemm_kernel(%arg0: i32, %arg1: memref<64x16xf32, #tpu.memory_space<vmem>>, %arg2: memref<16x256xf32, #tpu.memory_space<vmem>>, %arg3: memref<64x256xf32, #tpu.memory_space<vmem>>) attributes {dimension_semantics = [#tpu.dimension_semantics<parallel>], iteration_bounds = array<i64: 2>, scalar_prefetch = 0 : i64, scratch_operands = 0 : i64, tpu.core_type = #tpu.core_type<tc>, window_params = [{transform_indices = @transform_0, window_bounds = array<i64: 64, 16>}, {pipeline_mode = #tpu.pipeline_mode<synchronous>, transform_indices = @transform_1, window_bounds = array<i64: 16, 256>}, {transform_indices = @transform_2, window_bounds = array<i64: 64, 256>}]} {
    %c0 = arith.constant 0 : index
    %c0_0 = arith.constant 0 : index
    %0 = vector.load %arg1[%c0, %c0_0] : memref<64x16xf32, #tpu.memory_space<vmem>>, vector<64x16xf32>
    %c0_1 = arith.constant 0 : index
    %c0_2 = arith.constant 0 : index
    %1 = vector.load %arg2[%c0_1, %c0_2] : memref<16x256xf32, #tpu.memory_space<vmem>>, vector<16x256xf32>
    %cst = arith.constant dense<0.000000e+00> : vector<64x256xf32>
    %2 = tpu.matmul %0, %1, %cst {dimension_numbers = #tpu.dot_dimension_numbers<[1], [0], [0], [1], [0, 0, 1, 1], [], []>} : vector<64x16xf32>, vector<16x256xf32>, vector<64x256xf32> -> vector<64x256xf32>
    %c0_3 = arith.constant 0 : index
    %c0_4 = arith.constant 0 : index
    %3 = vector.load %arg3[%c0_3, %c0_4] : memref<64x256xf32, #tpu.memory_space<vmem>>, vector<64x256xf32>
    tpu.vector_store %arg3[%c0_3, %c0_4], %2 {strides = array<i32>} : memref<64x256xf32, #tpu.memory_space<vmem>>, vector<64x256xf32>,
    return
  }
  func.func @transform_0(%arg0: i32) -> (i32, i32) {
    %c0_i32 = arith.constant 0 : i32
    %c0_i32_0 = arith.constant 0 : i32
    return %arg0, %c0_i32 : i32, i32
  }
  func.func @transform_1(%arg0: i32) -> (i32, i32) {
    %c0_i32 = arith.constant 0 : i32
    %c0_i32_0 = arith.constant 0 : i32
    %c0_i32_1 = arith.constant 0 : i32
    return %c0_i32, %c0_i32_0 : i32, i32
  }
  func.func @transform_2(%arg0: i32) -> (i32, i32) {
    %c0_i32 = arith.constant 0 : i32
    %c0_i32_0 = arith.constant 0 : i32
    return %arg0, %c0_i32 : i32, i32
  }
}

module attributes {stable_mosaic.version = 11 : i64} {
  func.func @_gemm_kernel(%arg0: i32, %arg1: memref<256x16xf32, #tpu.memory_space<vmem>>, %arg2: memref<16x256xf32, #tpu.memory_space<vmem>>, %arg3: memref<256x256xf32, #tpu.memory_space<vmem>>) attributes {dimension_semantics = [#tpu.dimension_semantics<parallel>], iteration_bounds = array<i64: 2>, scalar_prefetch = 0 : i64, scratch_operands = 0 : i64, tpu.core_type = #tpu.core_type<tc>, window_params = [{transform_indices = @transform_0, window_bounds = array<i64: 256, 16>}, {pipeline_mode = #tpu.pipeline_mode<synchronous>, transform_indices = @transform_1, window_bounds = array<i64: 16, 256>}, {transform_indices = @transform_2, window_bounds = array<i64: 256, 256>}]} {
    %c0 = arith.constant 0 : index
    %c0_0 = arith.constant 0 : index
    %0 = vector.load %arg1[%c0, %c0_0] : memref<256x16xf32, #tpu.memory_space<vmem>>, vector<256x16xf32>
    %c0_1 = arith.constant 0 : index
    %c0_2 = arith.constant 0 : index
    %1 = vector.load %arg2[%c0_1, %c0_2] : memref<16x256xf32, #tpu.memory_space<vmem>>, vector<16x256xf32>
    %cst = arith.constant dense<0.000000e+00> : vector<256x256xf32>
    %2 = tpu.matmul %0, %1, %cst {dimension_numbers = #tpu.dot_dimension_numbers<[1], [0], [0], [1], [0, 0, 1, 1], [], []>} : vector<256x16xf32>, vector<16x256xf32>, vector<256x256xf32> -> vector<256x256xf32>
    %c0_3 = arith.constant 0 : index
    %c0_4 = arith.constant 0 : index
    %3 = vector.load %arg3[%c0_3, %c0_4] : memref<256x256xf32, #tpu.memory_space<vmem>>, vector<256x256xf32>
    tpu.vector_store %arg3[%c0_3, %c0_4], %2 {strides = array<i32>} : memref<256x256xf32, #tpu.memory_space<vmem>>, vector<256x256xf32>,
    return
  }
  func.func @transform_0(%arg0: i32) -> (i32, i32) {
    %c0_i32 = arith.constant 0 : i32
    %c0_i32_0 = arith.constant 0 : i32
    return %arg0, %c0_i32 : i32, i32
  }
  func.func @transform_1(%arg0: i32) -> (i32, i32) {
    %c0_i32 = arith.constant 0 : i32
    %c0_i32_0 = arith.constant 0 : i32
    %c0_i32_1 = arith.constant 0 : i32
    return %c0_i32, %c0_i32_0 : i32, i32
  }
  func.func @transform_2(%arg0: i32) -> (i32, i32) {
    %c0_i32 = arith.constant 0 : i32
    %c0_i32_0 = arith.constant 0 : i32
    return %arg0, %c0_i32 : i32, i32
  }
}

module attributes {stable_mosaic.version = 11 : i64} {
  func.func @_gemm_bias_kernel(%arg0: i32, %arg1: memref<3x16xf32, #tpu.memory_space<vmem>>, %arg2: memref<16x1024xf32, #tpu.memory_space<vmem>>, %arg3: memref<3x1xf32, #tpu.memory_space<vmem>>, %arg4: memref<3x1024xf32, #tpu.memory_space<vmem>>) attributes {dimension_semantics = [#tpu.dimension_semantics<parallel>], iteration_bounds = array<i64: 2>, scalar_prefetch = 0 : i64, scratch_operands = 0 : i64, tpu.core_type = #tpu.core_type<tc>, window_params = [{pipeline_mode = #tpu.pipeline_mode<synchronous>, transform_indices = @transform_0, window_bounds = array<i64: 3, 16>}, {transform_indices = @transform_1, window_bounds = array<i64: 16, 1024>}, {pipeline_mode = #tpu.pipeline_mode<synchronous>, transform_indices = @transform_2, window_bounds = array<i64: 3, 1>}, {transform_indices = @transform_3, window_bounds = array<i64: 3, 1024>}]} {
    %c0 = arith.constant 0 : index
    %c0_0 = arith.constant 0 : index
    %0 = vector.load %arg1[%c0, %c0_0] : memref<3x16xf32, #tpu.memory_space<vmem>>, vector<3x16xf32>
    %c0_1 = arith.constant 0 : index
    %c0_2 = arith.constant 0 : index
    %1 = vector.load %arg2[%c0_1, %c0_2] : memref<16x1024xf32, #tpu.memory_space<vmem>>, vector<16x1024xf32>
    %cst = arith.constant dense<0.000000e+00> : vector<3x1024xf32>
    %2 = tpu.matmul %0, %1, %cst {dimension_numbers = #tpu.dot_dimension_numbers<[1], [0], [0], [1], [0, 0, 1, 1], [], []>} : vector<3x16xf32>, vector<16x1024xf32>, vector<3x1024xf32> -> vector<3x1024xf32>
    %c0_3 = arith.constant 0 : index
    %c0_4 = arith.constant 0 : index
    %3 = vector.load %arg3[%c0_3, %c0_4] : memref<3x1xf32, #tpu.memory_space<vmem>>, vector<3x1xf32>
    %4 = vector.broadcast %3 : vector<3x1xf32> to vector<3x1024xf32>
    %5 = arith.addf %2, %4 : vector<3x1024xf32>
    %c0_5 = arith.constant 0 : index
    %c0_6 = arith.constant 0 : index
    %6 = vector.load %arg4[%c0_5, %c0_6] : memref<3x1024xf32, #tpu.memory_space<vmem>>, vector<3x1024xf32>
    tpu.vector_store %arg4[%c0_5, %c0_6], %5 {strides = array<i32>} : memref<3x1024xf32, #tpu.memory_space<vmem>>, vector<3x1024xf32>,
    return
  }
  func.func @transform_0(%arg0: i32) -> (i32, i32) {
    %c0_i32 = arith.constant 0 : i32
    %c0_i32_0 = arith.constant 0 : i32
    %c0_i32_1 = arith.constant 0 : i32
    return %c0_i32, %c0_i32_0 : i32, i32
  }
  func.func @transform_1(%arg0: i32) -> (i32, i32) {
    %c0_i32 = arith.constant 0 : i32
    %c0_i32_0 = arith.constant 0 : i32
    return %c0_i32, %arg0 : i32, i32
  }
  func.func @transform_2(%arg0: i32) -> (i32, i32) {
    %c0_i32 = arith.constant 0 : i32
    %c0_i32_0 = arith.constant 0 : i32
    %c0_i32_1 = arith.constant 0 : i32
    return %c0_i32, %c0_i32_0 : i32, i32
  }
  func.func @transform_3(%arg0: i32) -> (i32, i32) {
    %c0_i32 = arith.constant 0 : i32
    %c0_i32_0 = arith.constant 0 : i32
    return %c0_i32, %arg0 : i32, i32
  }
}

</mosaic_0001>

<llo_original>
// kernel: decoder_forward.4
$region0: #{decoder_forward.4}
  #allocation0 [shape = 'u32[]', space=smem, size = 0x4, offset = 0x4, fixed_abs, tag = 'smem constant byte address 0x4 - core index']
  #allocation1 [shape = 'u32[72,128]{1,0:T(1,128)}', space=vmem, size = 0x9000, scoped, tag = 'internal scratch']
  %s0 = inlined_call_operand.hbm [shape: f32[32,8], index: 0, kind: input, shape index: {}]
  %s1 = inlined_call_operand.vmem [shape: f32[8,256], index: 1, kind: input, shape index: {}]
  %s2 = inlined_call_operand.vmem [shape: f32[32,256], index: 2, kind: output, shape index: {}]
  %s3 = sld [smem:[#allocation0]]
  $region22: #{decoder_forward.4} parent=0
    _
  %s5 = ssub.s32 1, %s3
  %s6 = scalar_select 0, %s5, %s3
  $region1: #{decoder_forward.4} parent=0
    #allocation2 [shape = 'u8[16384]{0}', space=vmem, size = 0x4000, scoped, tag = 'input window, operand 0, single buffered']
    #allocation3 [shape = 's32[1]{0}', space=sflag, size = 0x4, scoped, tag = 'scoped memory for decoder_forward.4']
    %7 = vsyncpa [#allocation3], 0
    // Predicated region
    $region2: #{decoder_forward.4} parent=1 // pred_check
      _
    $region3: #{decoder_forward.4} parent=1 // pred_check_branch
      %9 = sbr.rel (0) target = $region5
    $region4: #{decoder_forward.4} parent=1 // pred_region
      %11 = vsyncadd [#allocation3], 0
      %s12 = sshll.u32 %s0, 4
      %s13 = int_to_ptr.hbm [resolvable:$true] %s12
      %s14 = sshll.u32 [#allocation2], 4
      %s15 = int_to_ptr.vmem [resolvable:$true] %s14
      %20 = dma.hbm_to_vmem [thread:$0]  %s13, 512, %s15, [#allocation3], 128, 128, 8
    $region5: #{decoder_forward.4} parent=1 // pred_fallthru
      _
    // Predicated region
    $region6: #{decoder_forward.4} parent=1 // pred_check
      _
    $region7: #{decoder_forward.4} parent=1 // pred_check_branch
      %22 = sbr.rel (0) target = $region9
    $region8: #{decoder_forward.4} parent=1 // pred_region
      _
    $region9: #{decoder_forward.4} parent=1 // pred_fallthru
      _
    // Predicated region
    $region10: #{decoder_forward.4} parent=1 // pred_check
      _
    $region11: #{decoder_forward.4} parent=1 // pred_check_branch
      %24 = sbr.rel (0) target = $region13
    $region12: #{decoder_forward.4} parent=1 // pred_region
      %26 = dma.done [#allocation3], 512
    $region13: #{decoder_forward.4} parent=1 // pred_fallthru
      _
    %v27 = vld [vmem:[#allocation2] sm:$0xff]
    %v28 = vld [vmem:[#allocation2 + $0x8] sm:$0xff]
    %v29 = vld [vmem:[#allocation2 + $0x10] sm:$0xff]
    %v30 = vld [vmem:[#allocation2 + $0x18] sm:$0xff]
    %v31 = vld [vmem:[%s1] sm:$0xff]
    %v32 = vld [vmem:[%s1 + $0x8] sm:$0xff]
    %vm33 = vcmask 64512
    %v35 = vsel %vm33, %v27, 0
    %v38 = vsel %vm33, %v28, 0
    %v41 = vsel %vm33, %v29, 0
    %v44 = vsel %vm33, %v30, 0
    %46 = vmatpush.msra.mxu0 0.0
    %47 = vmatpush.msra.mxu0 0.0
    %48 = vmatpush.msra.mxu0 0.0
    %49 = vmatpush.msra.mxu0 0.0
    %50 = vmatpush.msra.mxu0 0.0
    %51 = vmatpush.msra.mxu0 0.0
    %52 = vmatpush.msra.mxu0 0.0
    %53 = vmatpush.msra.mxu0 0.0
    %54 = vmatpush.msra.mxu0 0.0
    %55 = vmatpush.msra.mxu0 0.0
    %56 = vmatpush.msra.mxu0 0.0
    %57 = vmatpush.msra.mxu0 0.0
    %58 = vmatpush.msra.mxu0 0.0
    %59 = vmatpush.msra.mxu0 0.0
    %60 = vmatpush.msra.mxu0 0.0
    %61 = vmatpush.msra.mxu0 %v31
    %62 = vmatmul.f32.gmra.mxu0 %v35
    %v63 = vpop.f32.mrf.mxu0
    %v64 = vadd.f32 0.0, %v63
    %65 = vmatmul.f32.gmra.mxu0 %v38
    %v66 = vpop.f32.mrf.mxu0
    %v67 = vadd.f32 0.0, %v66
    %68 = vmatmul.f32.gmra.mxu0 %v41
    %v69 = vpop.f32.mrf.mxu0
    %v70 = vadd.f32 0.0, %v69
    %71 = vmatmul.f32.gmra.mxu0 %v44
    %v72 = vpop.f32.mrf.mxu0
    %v73 = vadd.f32 0.0, %v72
    %74 = vdwg.mxu0
    %75 = vmatpush.msra.mxu0 0.0
    %76 = vmatpush.msra.mxu0 0.0
    %77 = vmatpush.msra.mxu0 0.0
    %78 = vmatpush.msra.mxu0 0.0
    %79 = vmatpush.msra.mxu0 0.0
    %80 = vmatpush.msra.mxu0 0.0
    %81 = vmatpush.msra.mxu0 0.0
    %82 = vmatpush.msra.mxu0 0.0
    %83 = vmatpush.msra.mxu0 0.0
    %84 = vmatpush.msra.mxu0 0.0
    %85 = vmatpush.msra.mxu0 0.0
    %86 = vmatpush.msra.mxu0 0.0
    %87 = vmatpush.msra.mxu0 0.0
    %88 = vmatpush.msra.mxu0 0.0
    %89 = vmatpush.msra.mxu0 0.0
    %90 = vmatpush.msra.mxu0 %v32
    %91 = vmatmul.f32.gmra.mxu0 %v35
    %v92 = vpop.f32.mrf.mxu0
    %v93 = vadd.f32 0.0, %v92
    %94 = vmatmul.f32.gmra.mxu0 %v38
    %v95 = vpop.f32.mrf.mxu0
    %v96 = vadd.f32 0.0, %v95
    %97 = vmatmul.f32.gmra.mxu0 %v41
    %v98 = vpop.f32.mrf.mxu0
    %v99 = vadd.f32 0.0, %v98
    %100 = vmatmul.f32.gmra.mxu0 %v44
    %v101 = vpop.f32.mrf.mxu0
    %v102 = vadd.f32 0.0, %v101
    %103 = vdwg.mxu0
    %104 = vst [vmem:[%s2] sm:$0xff] %v64
    %105 = vst [vmem:[%s2 + $0x8] sm:$0xff] %v93
    %106 = vst [vmem:[%s2 + $0x10] sm:$0xff] %v67
    %107 = vst [vmem:[%s2 + $0x18] sm:$0xff] %v96
    %108 = vst [vmem:[%s2 + $0x20] sm:$0xff] %v70
    %109 = vst [vmem:[%s2 + $0x28] sm:$0xff] %v99
    %110 = vst [vmem:[%s2 + $0x30] sm:$0xff] %v73
    %111 = vst [vmem:[%s2 + $0x38] sm:$0xff] %v102
    // Predicated region
    $region14: #{decoder_forward.4} parent=1 // pred_check
      _
    $region15: #{decoder_forward.4} parent=1 // pred_check_branch
      %113 = sbr.rel (0) target = $region17
    $region16: #{decoder_forward.4} parent=1 // pred_region
      _
    $region17: #{decoder_forward.4} parent=1 // pred_fallthru
      _
    // Predicated region
    $region18: #{decoder_forward.4} parent=1 // pred_check
      _
    $region19: #{decoder_forward.4} parent=1 // pred_check_branch
      %115 = sbr.rel (0) target = $region21
    $region20: #{decoder_forward.4} parent=1 // pred_region
      _
    $region21: #{decoder_forward.4} parent=1 // pred_fallthru
      _
    %116 = vsyncpa [#allocation3], 1

// kernel: decoder_forward.5
$region0: #{decoder_forward.5}
  #allocation0 [shape = 'u32[]', space=smem, size = 0x4, offset = 0x4, fixed_abs, tag = 'smem constant byte address 0x4 - core index']
  #allocation1 [shape = 'u32[72,128]{1,0:T(1,128)}', space=vmem, size = 0x9000, scoped, tag = 'internal scratch']
  %s0 = inlined_call_operand.vmem [shape: f32[128,16], index: 0, kind: input, shape index: {}]
  %s1 = inlined_call_operand.vmem [shape: f32[16,256], index: 1, kind: input, shape index: {}]
  %s2 = inlined_call_operand.vmem [shape: f32[128,256], index: 2, kind: output, shape index: {}]
  %s3 = sld [smem:[#allocation0]]
  $region41: #{decoder_forward.5} parent=0
    _
  %s5 = ssub.s32 1, %s3
  %s6 = scalar_select 0, %s5, %s3
  loop: start=0, step=1, limit=4
  $region2: #{decoder_forward.5} parent=0 // loop_pre_header
    _
  $region3: #{decoder_forward.5} parent=0 // loop_header
    %s8 = sphi 0, %s12
    %p9 = scmp.ge.s32.totalorder %s8, 4
    %s18 = sphi 0, %s20
    %s21 = sphi 0, %s18
    %s22 = sphi 0, %s21
    %s38 = sphi 0, %s22
    %s42 = sphi 0, %s42
    %s44 = sphi 0, %s42
    %s45 = sphi 0, %s44
    %s59 = sphi 0, %s45
    %s65 = sphi 0, %s67
    %s68 = sphi 0, %s65
    %s69 = sphi 0, %s68
    %s85 = sphi 0, %s69
  $region4: #{decoder_forward.5} parent=0 // loop_header_branch
    %11 = sbr.rel (%p9) target = $region8
  $region5: #{decoder_forward.5} parent=0 // loop_body
    %s13 = ssub.s32 %s8, 1
    %s14 = ssub.s32 %s8, 2
    %s15 = sadd.s32 %s8, 1
    %s16 = ssub.s32 %s8, %s15
    %p17 = scmp.eq.s32.totalorder %s16, 0
    %s19 = sadd.s32 %s18, 1
    %s20 = scalar_select %p17, %s18, %s19
    %p23 = pneg %p17
    %p24 = scmp.eq.s32.totalorder %s8, 1
    %p25 = por %p23, %p24
    %p26 = scmp.ne.s32.totalorder %s18, %s21
    %p27 = scmp.eq.s32.totalorder %s8, 0
    %p28 = por %p26, %p27
    %p29 = scmp.ne.s32.totalorder %s18, %s21
    %p30 = scmp.eq.s32.totalorder %s13, 1
    %p31 = por %p29, %p30
    %p32 = scmp.ne.s32.totalorder %s21, %s22
    %p33 = scmp.eq.s32.totalorder %s13, 0
    %p34 = por %p32, %p33
    %p35 = scmp.ne.s32.totalorder %s21, %s22
    %p36 = scmp.eq.s32.totalorder %s14, 1
    %p37 = por %p35, %p36
    %p39 = scmp.ne.s32.totalorder %s22, %s38
    %p40 = scmp.eq.s32.totalorder %s14, 0
    %p41 = por %p39, %p40
    %s43 = sadd.s32 %s42, 1
    %p46 = scmp.eq.s32.totalorder %s8, 1
    %p47 = scmp.ne.s32.totalorder %s42, %s44
    %p48 = scmp.eq.s32.totalorder %s8, 0
    %p49 = por %p47, %p48
    %p50 = scmp.ne.s32.totalorder %s42, %s44
    %p51 = scmp.eq.s32.totalorder %s13, 1
    %p52 = por %p50, %p51
    %p53 = scmp.ne.s32.totalorder %s44, %s45
    %p54 = scmp.eq.s32.totalorder %s13, 0
    %p55 = por %p53, %p54
    %p56 = scmp.ne.s32.totalorder %s44, %s45
    %p57 = scmp.eq.s32.totalorder %s14, 1
    %p58 = por %p56, %p57
    %p60 = scmp.ne.s32.totalorder %s45, %s59
    %p61 = scmp.eq.s32.totalorder %s14, 0
    %p62 = por %p60, %p61
    %s63 = ssub.s32 %s8, %s15
    %p64 = scmp.eq.s32.totalorder %s63, 0
    %s66 = sadd.s32 %s65, 1
    %s67 = scalar_select %p64, %s65, %s66
    %p70 = pneg %p64
    %p71 = scmp.eq.s32.totalorder %s8, 1
    %p72 = por %p70, %p71
    %p73 = scmp.ne.s32.totalorder %s65, %s68
    %p74 = scmp.eq.s32.totalorder %s8, 0
    %p75 = por %p73, %p74
    %p76 = scmp.ne.s32.totalorder %s65, %s68
    %p77 = scmp.eq.s32.totalorder %s13, 1
    %p78 = por %p76, %p77
    %p79 = scmp.ne.s32.totalorder %s68, %s69
    %p80 = scmp.eq.s32.totalorder %s13, 0
    %p81 = por %p79, %p80
    %p82 = scmp.ne.s32.totalorder %s68, %s69
    %p83 = scmp.eq.s32.totalorder %s14, 1
    %p84 = por %p82, %p83
    %p86 = scmp.ne.s32.totalorder %s69, %s85
    %p87 = scmp.eq.s32.totalorder %s14, 0
    %p88 = por %p86, %p87
    %p89 = scmp.le.s32.totalorder 1, %s8
    %p90 = scmp.lt.s32.totalorder %s8, 3
    %p91 = pnand %p89, %p90
    %p92 = pneg %p91
    // Predicated region
    $region9: #{decoder_forward.5} parent=5 // pred_check
      _
    $region10: #{decoder_forward.5} parent=5 // pred_check_branch
      %94 = sbr.rel (%p91) target = $region12
    $region11: #{decoder_forward.5} parent=5 // pred_region
      %s95 = ssub.s32 %s8, 1
      // Predicated region
      $region13: #{decoder_forward.5} parent=11 // pred_check
        %p96 = pneg %p55
      $region14: #{decoder_forward.5} parent=11 // pred_check_branch
        %98 = sbr.rel (%p96) target = $region16
      $region15: #{decoder_forward.5} parent=11 // pred_region
        _
      $region16: #{decoder_forward.5} parent=11 // pred_fallthru
        _
    $region12: #{decoder_forward.5} parent=5 // pred_fallthru
      _
    %p99 = scmp.lt.s32.totalorder %s8, 2
    // Predicated region
    $region17: #{decoder_forward.5} parent=5 // pred_check
      %p100 = pneg %p99
    $region18: #{decoder_forward.5} parent=5 // pred_check_branch
      %102 = sbr.rel (%p100) target = $region20
    $region19: #{decoder_forward.5} parent=5 // pred_region
      // Predicated region
      $region21: #{decoder_forward.5} parent=19 // pred_check
        %p103 = pneg %p28
      $region22: #{decoder_forward.5} parent=19 // pred_check_branch
        %105 = sbr.rel (%p103) target = $region24
      $region23: #{decoder_forward.5} parent=19 // pred_region
        %s106 = smul.u32 8, %s8
        %p107 = scmp.lt.s32.totalorder %s106, 15
        %s108 = scalar_select %p107, %s106, 15
        %s109 = smul.addr %s108, 8
        %s110 = scalar_lea.vmem %s0, %s109
        %s111 = smul.u32 8, %s8
      $region24: #{decoder_forward.5} parent=19 // pred_fallthru
        _
    $region20: #{decoder_forward.5} parent=5 // pred_fallthru
      _
    %p112 = scmp.le.s32.totalorder 1, %s8
    %p113 = scmp.lt.s32.totalorder %s8, 3
    %p114 = pnand %p112, %p113
    %p115 = pneg %p114
    // Predicated region
    $region25: #{decoder_forward.5} parent=5 // pred_check
      _
    $region26: #{decoder_forward.5} parent=5 // pred_check_branch
      %117 = sbr.rel (%p114) target = $region28
    $region27: #{decoder_forward.5} parent=5 // pred_region
      %s118 = ssub.s32 %s8, 1
      %s119 = smul.u32 8, %s13
      %p120 = scmp.lt.s32.totalorder %s119, 15
      %s121 = scalar_select %p120, %s119, 15
      %s122 = smul.addr %s121, 8
      %s123 = scalar_lea.vmem %s0, %s122
      %p124 = pneg %p34
      %p125 = pneg %p31
      %p126 = pneg %p55
      %p127 = pneg %p52
      %p128 = pneg %p81
      %p129 = pneg %p78
      %s130 = smul.u32 8, %s13
      %p131 = scmp.lt.s32.totalorder %s130, 15
      %s132 = scalar_select %p131, %s130, 15
      %s133 = smul.addr %s132, 2
      %s134 = smul.addr %s133, 8
      %s135 = scalar_lea.vmem %s2, %s134
      %s136 = smul.u32 8, %s13
      %p137 = scmp.lt.s32.totalorder %s136, 15
      %s138 = scalar_select %p137, %s136, 15
      %s139 = smul.addr %s138, 8
      %s140 = scalar_lea.vmem %s0, %s139
      %s141 = smul.u32 8, %s13
      %s142 = smul.u32 8, %s13
      %p143 = scmp.lt.s32.totalorder %s142, 15
      %s144 = scalar_select %p143, %s142, 15
      %s145 = smul.addr %s144, 2
      %s146 = smul.addr %s145, 8
      %s147 = scalar_lea.vmem %s2, %s146
      %s148 = smul.u32 8, %s13
      %v149 = vld [vmem:[%s140] sm:$0xff]
      %v150 = vld [vmem:[%s140 + $0x8] sm:$0xff]
      %v151 = vld [vmem:[%s140 + $0x10] sm:$0xff]
      %v152 = vld [vmem:[%s140 + $0x18] sm:$0xff]
      %v153 = vld [vmem:[%s140 + $0x20] sm:$0xff]
      %v154 = vld [vmem:[%s140 + $0x28] sm:$0xff]
      %v155 = vld [vmem:[%s140 + $0x30] sm:$0xff]
      %v156 = vld [vmem:[%s140 + $0x38] sm:$0xff]
      %v157 = vld [vmem:[%s1] sm:$0xff]
      %v158 = vld [vmem:[%s1 + $0x8] sm:$0xff]
      %v159 = vld [vmem:[%s1 + $0x10] sm:$0xff]
      %v160 = vld [vmem:[%s1 + $0x18] sm:$0xff]
      %vm161 = vcmask 130048
      %v163 = vsel %vm161, %v149, 0
      %v166 = vsel %vm161, %v150, 0
      %v169 = vsel %vm161, %v151, 0
      %v172 = vsel %vm161, %v152, 0
      %v175 = vsel %vm161, %v153, 0
      %v178 = vsel %vm161, %v154, 0
      %v181 = vsel %vm161, %v155, 0
      %v184 = vsel %vm161, %v156, 0
      %186 = vmatpush.msra.mxu0 0.0
      %187 = vmatpush.msra.mxu0 0.0
      %188 = vmatpush.msra.mxu0 0.0
      %189 = vmatpush.msra.mxu0 0.0
      %190 = vmatpush.msra.mxu0 0.0
      %191 = vmatpush.msra.mxu0 0.0
      %192 = vmatpush.msra.mxu0 0.0
      %193 = vmatpush.msra.mxu0 0.0
      %194 = vmatpush.msra.mxu0 0.0
      %195 = vmatpush.msra.mxu0 0.0
      %196 = vmatpush.msra.mxu0 0.0
      %197 = vmatpush.msra.mxu0 0.0
      %198 = vmatpush.msra.mxu0 0.0
      %199 = vmatpush.msra.mxu0 0.0
      %200 = vmatpush.msra.mxu0 %v159
      %201 = vmatpush.msra.mxu0 %v157
      %202 = vmatmul.f32.gmra.mxu0 %v163
      %v203 = vpop.f32.mrf.mxu0
      %v204 = vadd.f32 0.0, %v203
      %205 = vmatmul.f32.gmra.mxu0 %v166
      %v206 = vpop.f32.mrf.mxu0
      %v207 = vadd.f32 0.0, %v206
      %208 = vmatmul.f32.gmra.mxu0 %v169
      %v209 = vpop.f32.mrf.mxu0
      %v210 = vadd.f32 0.0, %v209
      %211 = vmatmul.f32.gmra.mxu0 %v172
      %v212 = vpop.f32.mrf.mxu0
      %v213 = vadd.f32 0.0, %v212
      %214 = vmatmul.f32.gmra.mxu0 %v175
      %v215 = vpop.f32.mrf.mxu0
      %v216 = vadd.f32 0.0, %v215
      %217 = vmatmul.f32.gmra.mxu0 %v178
      %v218 = vpop.f32.mrf.mxu0
      %v219 = vadd.f32 0.0, %v218
      %220 = vmatmul.f32.gmra.mxu0 %v181
      %v221 = vpop.f32.mrf.mxu0
      %v222 = vadd.f32 0.0, %v221
      %223 = vmatmul.f32.gmra.mxu0 %v184
      %v224 = vpop.f32.mrf.mxu0
      %v225 = vadd.f32 0.0, %v224
      %226 = vdwg.mxu0
      %227 = vmatpush.msra.mxu0 0.0
      %228 = vmatpush.msra.mxu0 0.0
      %229 = vmatpush.msra.mxu0 0.0
      %230 = vmatpush.msra.mxu0 0.0
      %231 = vmatpush.msra.mxu0 0.0
      %232 = vmatpush.msra.mxu0 0.0
      %233 = vmatpush.msra.mxu0 0.0
      %234 = vmatpush.msra.mxu0 0.0
      %235 = vmatpush.msra.mxu0 0.0
      %236 = vmatpush.msra.mxu0 0.0
      %237 = vmatpush.msra.mxu0 0.0
      %238 = vmatpush.msra.mxu0 0.0
      %239 = vmatpush.msra.mxu0 0.0
      %240 = vmatpush.msra.mxu0 0.0
      %241 = vmatpush.msra.mxu0 %v160
      %242 = vmatpush.msra.mxu0 %v158
      %243 = vmatmul.f32.gmra.mxu0 %v163
      %v244 = vpop.f32.mrf.mxu0
      %v245 = vadd.f32 0.0, %v244
      %246 = vmatmul.f32.gmra.mxu0 %v166
      %v247 = vpop.f32.mrf.mxu0
      %v248 = vadd.f32 0.0, %v247
      %249 = vmatmul.f32.gmra.mxu0 %v169
      %v250 = vpop.f32.mrf.mxu0
      %v251 = vadd.f32 0.0, %v250
      %252 = vmatmul.f32.gmra.mxu0 %v172
      %v253 = vpop.f32.mrf.mxu0
      %v254 = vadd.f32 0.0, %v253
      %255 = vmatmul.f32.gmra.mxu0 %v175
      %v256 = vpop.f32.mrf.mxu0
      %v257 = vadd.f32 0.0, %v256
      %258 = vmatmul.f32.gmra.mxu0 %v178
      %v259 = vpop.f32.mrf.mxu0
      %v260 = vadd.f32 0.0, %v259
      %261 = vmatmul.f32.gmra.mxu0 %v181
      %v262 = vpop.f32.mrf.mxu0
      %v263 = vadd.f32 0.0, %v262
      %264 = vmatmul.f32.gmra.mxu0 %v184
      %v265 = vpop.f32.mrf.mxu0
      %v266 = vadd.f32 0.0, %v265
      %267 = vdwg.mxu0
      %268 = vst [vmem:[%s147] sm:$0xff] %v204
      %269 = vst [vmem:[%s147 + $0x8] sm:$0xff] %v245
      %270 = vst [vmem:[%s147 + $0x10] sm:$0xff] %v207
      %271 = vst [vmem:[%s147 + $0x18] sm:$0xff] %v248
      %272 = vst [vmem:[%s147 + $0x20] sm:$0xff] %v210
      %273 = vst [vmem:[%s147 + $0x28] sm:$0xff] %v251
      %274 = vst [vmem:[%s147 + $0x30] sm:$0xff] %v213
      %275 = vst [vmem:[%s147 + $0x38] sm:$0xff] %v254
      %276 = vst [vmem:[%s147 + $0x40] sm:$0xff] %v216
      %277 = vst [vmem:[%s147 + $0x48] sm:$0xff] %v257
      %278 = vst [vmem:[%s147 + $0x50] sm:$0xff] %v219
      %279 = vst [vmem:[%s147 + $0x58] sm:$0xff] %v260
      %280 = vst [vmem:[%s147 + $0x60] sm:$0xff] %v222
      %281 = vst [vmem:[%s147 + $0x68] sm:$0xff] %v263
      %282 = vst [vmem:[%s147 + $0x70] sm:$0xff] %v225
      %283 = vst [vmem:[%s147 + $0x78] sm:$0xff] %v266
      %s284 = smul.u32 8, %s13
      %p285 = scmp.lt.s32.totalorder %s284, 15
      %s286 = scalar_select %p285, %s284, 15
      %s287 = smul.addr %s286, 2
      %s288 = smul.addr %s287, 8
      %s289 = scalar_lea.vmem %s2, %s288
      // Predicated region
      $region29: #{decoder_forward.5} parent=27 // pred_check
        %p290 = pneg %p78
      $region30: #{decoder_forward.5} parent=27 // pred_check_branch
        %292 = sbr.rel (%p290) target = $region32
      $region31: #{decoder_forward.5} parent=27 // pred_region
        %s293 = smul.u32 8, %s13
      $region32: #{decoder_forward.5} parent=27 // pred_fallthru
        _
    $region28: #{decoder_forward.5} parent=5 // pred_fallthru
      _
    %p294 = scmp.le.s32.totalorder 2, %s8
    // Predicated region
    $region33: #{decoder_forward.5} parent=5 // pred_check
      %p295 = pneg %p294
    $region34: #{decoder_forward.5} parent=5 // pred_check_branch
      %297 = sbr.rel (%p295) target = $region36
    $region35: #{decoder_forward.5} parent=5 // pred_region
      %s298 = ssub.s32 %s8, 2
      // Predicated region
      $region37: #{decoder_forward.5} parent=35 // pred_check
        %p299 = pneg %p84
      $region38: #{decoder_forward.5} parent=35 // pred_check_branch
        %301 = sbr.rel (%p299) target = $region40
      $region39: #{decoder_forward.5} parent=35 // pred_region
        %s302 = smul.u32 8, %s14
        %p303 = scmp.lt.s32.totalorder %s302, 15
        %s304 = scalar_select %p303, %s302, 15
        %s305 = smul.addr %s304, 2
        %s306 = smul.addr %s305, 8
        %s307 = scalar_lea.vmem %s2, %s306
      $region40: #{decoder_forward.5} parent=35 // pred_fallthru
        _
    $region36: #{decoder_forward.5} parent=5 // pred_fallthru
      _
  $region6: #{decoder_forward.5} parent=0 // loop_footer
    %s12 = sadd.s32 1, %s8
  $region7: #{decoder_forward.5} parent=0 // loop_footer_branch
    %7 = sbr.rel target = $region3
  $region8: #{decoder_forward.5} parent=0 // loop_exit
    _

// kernel: decoder_forward.6
$region0: #{decoder_forward.6}
  #allocation0 [shape = 'u32[]', space=smem, size = 0x4, offset = 0x4, fixed_abs, tag = 'smem constant byte address 0x4 - core index']
  #allocation1 [shape = 'u32[72,128]{1,0:T(1,128)}', space=vmem, size = 0x9000, scoped, tag = 'internal scratch']
  %s0 = inlined_call_operand.vmem [shape: f32[512,16], index: 0, kind: input, shape index: {}]
  %s1 = inlined_call_operand.vmem [shape: f32[16,256], index: 1, kind: input, shape index: {}]
  %s2 = inlined_call_operand.vmem [shape: f32[512,256], index: 2, kind: output, shape index: {}]
  %s3 = sld [smem:[#allocation0]]
  $region41: #{decoder_forward.6} parent=0
    _
  %s5 = ssub.s32 1, %s3
  %s6 = scalar_select 0, %s5, %s3
  loop: start=0, step=1, limit=4
  $region2: #{decoder_forward.6} parent=0 // loop_pre_header
    _
  $region3: #{decoder_forward.6} parent=0 // loop_header
    %s8 = sphi 0, %s12
    %p9 = scmp.ge.s32.totalorder %s8, 4
    %s18 = sphi 0, %s20
    %s21 = sphi 0, %s18
    %s22 = sphi 0, %s21
    %s38 = sphi 0, %s22
    %s42 = sphi 0, %s42
    %s44 = sphi 0, %s42
    %s45 = sphi 0, %s44
    %s59 = sphi 0, %s45
    %s65 = sphi 0, %s67
    %s68 = sphi 0, %s65
    %s69 = sphi 0, %s68
    %s85 = sphi 0, %s69
  $region4: #{decoder_forward.6} parent=0 // loop_header_branch
    %11 = sbr.rel (%p9) target = $region8
  $region5: #{decoder_forward.6} parent=0 // loop_body
    %s13 = ssub.s32 %s8, 1
    %s14 = ssub.s32 %s8, 2
    %s15 = sadd.s32 %s8, 1
    %s16 = ssub.s32 %s8, %s15
    %p17 = scmp.eq.s32.totalorder %s16, 0
    %s19 = sadd.s32 %s18, 1
    %s20 = scalar_select %p17, %s18, %s19
    %p23 = pneg %p17
    %p24 = scmp.eq.s32.totalorder %s8, 1
    %p25 = por %p23, %p24
    %p26 = scmp.ne.s32.totalorder %s18, %s21
    %p27 = scmp.eq.s32.totalorder %s8, 0
    %p28 = por %p26, %p27
    %p29 = scmp.ne.s32.totalorder %s18, %s21
    %p30 = scmp.eq.s32.totalorder %s13, 1
    %p31 = por %p29, %p30
    %p32 = scmp.ne.s32.totalorder %s21, %s22
    %p33 = scmp.eq.s32.totalorder %s13, 0
    %p34 = por %p32, %p33
    %p35 = scmp.ne.s32.totalorder %s21, %s22
    %p36 = scmp.eq.s32.totalorder %s14, 1
    %p37 = por %p35, %p36
    %p39 = scmp.ne.s32.totalorder %s22, %s38
    %p40 = scmp.eq.s32.totalorder %s14, 0
    %p41 = por %p39, %p40
    %s43 = sadd.s32 %s42, 1
    %p46 = scmp.eq.s32.totalorder %s8, 1
    %p47 = scmp.ne.s32.totalorder %s42, %s44
    %p48 = scmp.eq.s32.totalorder %s8, 0
    %p49 = por %p47, %p48
    %p50 = scmp.ne.s32.totalorder %s42, %s44
    %p51 = scmp.eq.s32.totalorder %s13, 1
    %p52 = por %p50, %p51
    %p53 = scmp.ne.s32.totalorder %s44, %s45
    %p54 = scmp.eq.s32.totalorder %s13, 0
    %p55 = por %p53, %p54
    %p56 = scmp.ne.s32.totalorder %s44, %s45
    %p57 = scmp.eq.s32.totalorder %s14, 1
    %p58 = por %p56, %p57
    %p60 = scmp.ne.s32.totalorder %s45, %s59
    %p61 = scmp.eq.s32.totalorder %s14, 0
    %p62 = por %p60, %p61
    %s63 = ssub.s32 %s8, %s15
    %p64 = scmp.eq.s32.totalorder %s63, 0
    %s66 = sadd.s32 %s65, 1
    %s67 = scalar_select %p64, %s65, %s66
    %p70 = pneg %p64
    %p71 = scmp.eq.s32.totalorder %s8, 1
    %p72 = por %p70, %p71
    %p73 = scmp.ne.s32.totalorder %s65, %s68
    %p74 = scmp.eq.s32.totalorder %s8, 0
    %p75 = por %p73, %p74
    %p76 = scmp.ne.s32.totalorder %s65, %s68
    %p77 = scmp.eq.s32.totalorder %s13, 1
    %p78 = por %p76, %p77
    %p79 = scmp.ne.s32.totalorder %s68, %s69
    %p80 = scmp.eq.s32.totalorder %s13, 0
    %p81 = por %p79, %p80
    %p82 = scmp.ne.s32.totalorder %s68, %s69
    %p83 = scmp.eq.s32.totalorder %s14, 1
    %p84 = por %p82, %p83
    %p86 = scmp.ne.s32.totalorder %s69, %s85
    %p87 = scmp.eq.s32.totalorder %s14, 0
    %p88 = por %p86, %p87
    %p89 = scmp.le.s32.totalorder 1, %s8
    %p90 = scmp.lt.s32.totalorder %s8, 3
    %p91 = pnand %p89, %p90
    %p92 = pneg %p91
    // Predicated region
    $region9: #{decoder_forward.6} parent=5 // pred_check
      _
    $region10: #{decoder_forward.6} parent=5 // pred_check_branch
      %94 = sbr.rel (%p91) target = $region12
    $region11: #{decoder_forward.6} parent=5 // pred_region
      %s95 = ssub.s32 %s8, 1
      // Predicated region
      $region13: #{decoder_forward.6} parent=11 // pred_check
        %p96 = pneg %p55
      $region14: #{decoder_forward.6} parent=11 // pred_check_branch
        %98 = sbr.rel (%p96) target = $region16
      $region15: #{decoder_forward.6} parent=11 // pred_region
        _
      $region16: #{decoder_forward.6} parent=11 // pred_fallthru
        _
    $region12: #{decoder_forward.6} parent=5 // pred_fallthru
      _
    %p99 = scmp.lt.s32.totalorder %s8, 2
    // Predicated region
    $region17: #{decoder_forward.6} parent=5 // pred_check
      %p100 = pneg %p99
    $region18: #{decoder_forward.6} parent=5 // pred_check_branch
      %102 = sbr.rel (%p100) target = $region20
    $region19: #{decoder_forward.6} parent=5 // pred_region
      // Predicated region
      $region21: #{decoder_forward.6} parent=19 // pred_check
        %p103 = pneg %p28
      $region22: #{decoder_forward.6} parent=19 // pred_check_branch
        %105 = sbr.rel (%p103) target = $region24
      $region23: #{decoder_forward.6} parent=19 // pred_region
        %s106 = smul.u32 32, %s8
        %p107 = scmp.lt.s32.totalorder %s106, 63
        %s108 = scalar_select %p107, %s106, 63
        %s109 = smul.addr %s108, 8
        %s110 = scalar_lea.vmem %s0, %s109
        %s111 = smul.u32 32, %s8
      $region24: #{decoder_forward.6} parent=19 // pred_fallthru
        _
    $region20: #{decoder_forward.6} parent=5 // pred_fallthru
      _
    %p112 = scmp.le.s32.totalorder 1, %s8
    %p113 = scmp.lt.s32.totalorder %s8, 3
    %p114 = pnand %p112, %p113
    %p115 = pneg %p114
    // Predicated region
    $region25: #{decoder_forward.6} parent=5 // pred_check
      _
    $region26: #{decoder_forward.6} parent=5 // pred_check_branch
      %117 = sbr.rel (%p114) target = $region28
    $region27: #{decoder_forward.6} parent=5 // pred_region
      %s118 = ssub.s32 %s8, 1
      %s119 = smul.u32 32, %s13
      %p120 = scmp.lt.s32.totalorder %s119, 63
      %s121 = scalar_select %p120, %s119, 63
      %s122 = smul.addr %s121, 8
      %s123 = scalar_lea.vmem %s0, %s122
      %p124 = pneg %p34
      %p125 = pneg %p31
      %p126 = pneg %p55
      %p127 = pneg %p52
      %p128 = pneg %p81
      %p129 = pneg %p78
      %s130 = smul.u32 32, %s13
      %p131 = scmp.lt.s32.totalorder %s130, 63
      %s132 = scalar_select %p131, %s130, 63
      %s133 = smul.addr %s132, 2
      %s134 = smul.addr %s133, 8
      %s135 = scalar_lea.vmem %s2, %s134
      %s136 = smul.u32 32, %s13
      %p137 = scmp.lt.s32.totalorder %s136, 63
      %s138 = scalar_select %p137, %s136, 63
      %s139 = smul.addr %s138, 8
      %s140 = scalar_lea.vmem %s0, %s139
      %s141 = smul.u32 32, %s13
      %s142 = smul.u32 32, %s13
      %p143 = scmp.lt.s32.totalorder %s142, 63
      %s144 = scalar_select %p143, %s142, 63
      %s145 = smul.addr %s144, 2
      %s146 = smul.addr %s145, 8
      %s147 = scalar_lea.vmem %s2, %s146
      %s148 = smul.u32 32, %s13
      %v149 = vld [vmem:[%s140] sm:$0xff]
      %v150 = vld [vmem:[%s140 + $0x8] sm:$0xff]
      %v151 = vld [vmem:[%s140 + $0x10] sm:$0xff]
      %v152 = vld [vmem:[%s140 + $0x18] sm:$0xff]
      %v153 = vld [vmem:[%s140 + $0x20] sm:$0xff]
      %v154 = vld [vmem:[%s140 + $0x28] sm:$0xff]
      %v155 = vld [vmem:[%s140 + $0x30] sm:$0xff]
      %v156 = vld [vmem:[%s140 + $0x38] sm:$0xff]
      %v157 = vld [vmem:[%s140 + $0x40] sm:$0xff]
      %v158 = vld [vmem:[%s140 + $0x48] sm:$0xff]
      %v159 = vld [vmem:[%s140 + $0x50] sm:$0xff]
      %v160 = vld [vmem:[%s140 + $0x58] sm:$0xff]
      %v161 = vld [vmem:[%s140 + $0x60] sm:$0xff]
      %v162 = vld [vmem:[%s140 + $0x68] sm:$0xff]
      %v163 = vld [vmem:[%s140 + $0x70] sm:$0xff]
      %v164 = vld [vmem:[%s140 + $0x78] sm:$0xff]
      %v165 = vld [vmem:[%s140 + $0x80] sm:$0xff]
      %v166 = vld [vmem:[%s140 + $0x88] sm:$0xff]
      %v167 = vld [vmem:[%s140 + $0x90] sm:$0xff]
      %v168 = vld [vmem:[%s140 + $0x98] sm:$0xff]
      %v169 = vld [vmem:[%s140 + $0xa0] sm:$0xff]
      %v170 = vld [vmem:[%s140 + $0xa8] sm:$0xff]
      %v171 = vld [vmem:[%s140 + $0xb0] sm:$0xff]
      %v172 = vld [vmem:[%s140 + $0xb8] sm:$0xff]
      %v173 = vld [vmem:[%s140 + $0xc0] sm:$0xff]
      %v174 = vld [vmem:[%s140 + $0xc8] sm:$0xff]
      %v175 = vld [vmem:[%s140 + $0xd0] sm:$0xff]
      %v176 = vld [vmem:[%s140 + $0xd8] sm:$0xff]
      %v177 = vld [vmem:[%s140 + $0xe0] sm:$0xff]
      %v178 = vld [vmem:[%s140 + $0xe8] sm:$0xff]
      %v179 = vld [vmem:[%s140 + $0xf0] sm:$0xff]
      %v180 = vld [vmem:[%s140 + $0xf8] sm:$0xff]
      %v181 = vld [vmem:[%s1] sm:$0xff]
      %v182 = vld [vmem:[%s1 + $0x8] sm:$0xff]
      %v183 = vld [vmem:[%s1 + $0x10] sm:$0xff]
      %v184 = vld [vmem:[%s1 + $0x18] sm:$0xff]
      %vm185 = vcmask 130048
      %v187 = vsel %vm185, %v149, 0
      %v190 = vsel %vm185, %v150, 0
      %v193 = vsel %vm185, %v151, 0
      %v196 = vsel %vm185, %v152, 0
      %v199 = vsel %vm185, %v153, 0
      %v202 = vsel %vm185, %v154, 0
      %v205 = vsel %vm185, %v155, 0
      %v208 = vsel %vm185, %v156, 0
      %v211 = vsel %vm185, %v157, 0
      %v214 = vsel %vm185, %v158, 0
      %v217 = vsel %vm185, %v159, 0
      %v220 = vsel %vm185, %v160, 0
      %v223 = vsel %vm185, %v161, 0
      %v226 = vsel %vm185, %v162, 0
      %v229 = vsel %vm185, %v163, 0
      %v232 = vsel %vm185, %v164, 0
      %v235 = vsel %vm185, %v165, 0
      %v238 = vsel %vm185, %v166, 0
      %v241 = vsel %vm185, %v167, 0
      %v244 = vsel %vm185, %v168, 0
      %v247 = vsel %vm185, %v169, 0
      %v250 = vsel %vm185, %v170, 0
      %v253 = vsel %vm185, %v171, 0
      %v256 = vsel %vm185, %v172, 0
      %v259 = vsel %vm185, %v173, 0
      %v262 = vsel %vm185, %v174, 0
      %v265 = vsel %vm185, %v175, 0
      %v268 = vsel %vm185, %v176, 0
      %v271 = vsel %vm185, %v177, 0
      %v274 = vsel %vm185, %v178, 0
      %v277 = vsel %vm185, %v179, 0
      %v280 = vsel %vm185, %v180, 0
      %282 = vmatpush.msra.mxu0 0.0
      %283 = vmatpush.msra.mxu0 0.0
      %284 = vmatpush.msra.mxu0 0.0
      %285 = vmatpush.msra.mxu0 0.0
      %286 = vmatpush.msra.mxu0 0.0
      %287 = vmatpush.msra.mxu0 0.0
      %288 = vmatpush.msra.mxu0 0.0
      %289 = vmatpush.msra.mxu0 0.0
      %290 = vmatpush.msra.mxu0 0.0
      %291 = vmatpush.msra.mxu0 0.0
      %292 = vmatpush.msra.mxu0 0.0
      %293 = vmatpush.msra.mxu0 0.0
      %294 = vmatpush.msra.mxu0 0.0
      %295 = vmatpush.msra.mxu0 0.0
      %296 = vmatpush.msra.mxu0 %v183
      %297 = vmatpush.msra.mxu0 %v181
      %298 = vmatmul.f32.gmra.mxu0 %v187
      %v299 = vpop.f32.mrf.mxu0
      %v300 = vadd.f32 0.0, %v299
      %301 = vmatmul.f32.gmra.mxu0 %v190
      %v302 = vpop.f32.mrf.mxu0
      %v303 = vadd.f32 0.0, %v302
      %304 = vmatmul.f32.gmra.mxu0 %v193
      %v305 = vpop.f32.mrf.mxu0
      %v306 = vadd.f32 0.0, %v305
      %307 = vmatmul.f32.gmra.mxu0 %v196
      %v308 = vpop.f32.mrf.mxu0
      %v309 = vadd.f32 0.0, %v308
      %310 = vmatmul.f32.gmra.mxu0 %v199
      %v311 = vpop.f32.mrf.mxu0
      %v312 = vadd.f32 0.0, %v311
      %313 = vmatmul.f32.gmra.mxu0 %v202
      %v314 = vpop.f32.mrf.mxu0
      %v315 = vadd.f32 0.0, %v314
      %316 = vmatmul.f32.gmra.mxu0 %v205
      %v317 = vpop.f32.mrf.mxu0
      %v318 = vadd.f32 0.0, %v317
      %319 = vmatmul.f32.gmra.mxu0 %v208
      %v320 = vpop.f32.mrf.mxu0
      %v321 = vadd.f32 0.0, %v320
      %322 = vmatmul.f32.gmra.mxu0 %v211
      %v323 = vpop.f32.mrf.mxu0
      %v324 = vadd.f32 0.0, %v323
      %325 = vmatmul.f32.gmra.mxu0 %v214
      %v326 = vpop.f32.mrf.mxu0
      %v327 = vadd.f32 0.0, %v326
      %328 = vmatmul.f32.gmra.mxu0 %v217
      %v329 = vpop.f32.mrf.mxu0
      %v330 = vadd.f32 0.0, %v329
      %331 = vmatmul.f32.gmra.mxu0 %v220
      %v332 = vpop.f32.mrf.mxu0
      %v333 = vadd.f32 0.0, %v332
      %334 = vmatmul.f32.gmra.mxu0 %v223
      %v335 = vpop.f32.mrf.mxu0
      %v336 = vadd.f32 0.0, %v335
      %337 = vmatmul.f32.gmra.mxu0 %v226
      %v338 = vpop.f32.mrf.mxu0
      %v339 = vadd.f32 0.0, %v338
      %340 = vmatmul.f32.gmra.mxu0 %v229
      %v341 = vpop.f32.mrf.mxu0
      %v342 = vadd.f32 0.0, %v341
      %343 = vmatmul.f32.gmra.mxu0 %v232
      %v344 = vpop.f32.mrf.mxu0
      %v345 = vadd.f32 0.0, %v344
      %346 = vmatmul.f32.gmra.mxu0 %v235
      %v347 = vpop.f32.mrf.mxu0
      %v348 = vadd.f32 0.0, %v347
      %349 = vmatmul.f32.gmra.mxu0 %v238
      %v350 = vpop.f32.mrf.mxu0
      %v351 = vadd.f32 0.0, %v350
      %352 = vmatmul.f32.gmra.mxu0 %v241
      %v353 = vpop.f32.mrf.mxu0
      %v354 = vadd.f32 0.0, %v353
      %355 = vmatmul.f32.gmra.mxu0 %v244
      %v356 = vpop.f32.mrf.mxu0
      %v357 = vadd.f32 0.0, %v356
      %358 = vmatmul.f32.gmra.mxu0 %v247
      %v359 = vpop.f32.mrf.mxu0
      %v360 = vadd.f32 0.0, %v359
      %361 = vmatmul.f32.gmra.mxu0 %v250
      %v362 = vpop.f32.mrf.mxu0
      %v363 = vadd.f32 0.0, %v362
      %364 = vmatmul.f32.gmra.mxu0 %v253
      %v365 = vpop.f32.mrf.mxu0
      %v366 = vadd.f32 0.0, %v365
      %367 = vmatmul.f32.gmra.mxu0 %v256
      %v368 = vpop.f32.mrf.mxu0
      %v369 = vadd.f32 0.0, %v368
      %370 = vmatmul.f32.gmra.mxu0 %v259
      %v371 = vpop.f32.mrf.mxu0
      %v372 = vadd.f32 0.0, %v371
      %373 = vmatmul.f32.gmra.mxu0 %v262
      %v374 = vpop.f32.mrf.mxu0
      %v375 = vadd.f32 0.0, %v374
      %376 = vmatmul.f32.gmra.mxu0 %v265
      %v377 = vpop.f32.mrf.mxu0
      %v378 = vadd.f32 0.0, %v377
      %379 = vmatmul.f32.gmra.mxu0 %v268
      %v380 = vpop.f32.mrf.mxu0
      %v381 = vadd.f32 0.0, %v380
      %382 = vmatmul.f32.gmra.mxu0 %v271
      %v383 = vpop.f32.mrf.mxu0
      %v384 = vadd.f32 0.0, %v383
      %385 = vmatmul.f32.gmra.mxu0 %v274
      %v386 = vpop.f32.mrf.mxu0
      %v387 = vadd.f32 0.0, %v386
      %388 = vmatmul.f32.gmra.mxu0 %v277
      %v389 = vpop.f32.mrf.mxu0
      %v390 = vadd.f32 0.0, %v389
      %391 = vmatmul.f32.gmra.mxu0 %v280
      %v392 = vpop.f32.mrf.mxu0
      %v393 = vadd.f32 0.0, %v392
      %394 = vdwg.mxu0
      %395 = vmatpush.msra.mxu0 0.0
      %396 = vmatpush.msra.mxu0 0.0
      %397 = vmatpush.msra.mxu0 0.0
      %398 = vmatpush.msra.mxu0 0.0
      %399 = vmatpush.msra.mxu0 0.0
      %400 = vmatpush.msra.mxu0 0.0
      %401 = vmatpush.msra.mxu0 0.0
      %402 = vmatpush.msra.mxu0 0.0
      %403 = vmatpush.msra.mxu0 0.0
      %404 = vmatpush.msra.mxu0 0.0
      %405 = vmatpush.msra.mxu0 0.0
      %406 = vmatpush.msra.mxu0 0.0
      %407 = vmatpush.msra.mxu0 0.0
      %408 = vmatpush.msra.mxu0 0.0
      %409 = vmatpush.msra.mxu0 %v184
      %410 = vmatpush.msra.mxu0 %v182
      %411 = vmatmul.f32.gmra.mxu0 %v187
      %v412 = vpop.f32.mrf.mxu0
      %v413 = vadd.f32 0.0, %v412
      %414 = vmatmul.f32.gmra.mxu0 %v190
      %v415 = vpop.f32.mrf.mxu0
      %v416 = vadd.f32 0.0, %v415
      %417 = vmatmul.f32.gmra.mxu0 %v193
      %v418 = vpop.f32.mrf.mxu0
      %v419 = vadd.f32 0.0, %v418
      %420 = vmatmul.f32.gmra.mxu0 %v196
      %v421 = vpop.f32.mrf.mxu0
      %v422 = vadd.f32 0.0, %v421
      %423 = vmatmul.f32.gmra.mxu0 %v199
      %v424 = vpop.f32.mrf.mxu0
      %v425 = vadd.f32 0.0, %v424
      %426 = vmatmul.f32.gmra.mxu0 %v202
      %v427 = vpop.f32.mrf.mxu0
      %v428 = vadd.f32 0.0, %v427
      %429 = vmatmul.f32.gmra.mxu0 %v205
      %v430 = vpop.f32.mrf.mxu0
      %v431 = vadd.f32 0.0, %v430
      %432 = vmatmul.f32.gmra.mxu0 %v208
      %v433 = vpop.f32.mrf.mxu0
      %v434 = vadd.f32 0.0, %v433
      %435 = vmatmul.f32.gmra.mxu0 %v211
      %v436 = vpop.f32.mrf.mxu0
      %v437 = vadd.f32 0.0, %v436
      %438 = vmatmul.f32.gmra.mxu0 %v214
      %v439 = vpop.f32.mrf.mxu0
      %v440 = vadd.f32 0.0, %v439
      %441 = vmatmul.f32.gmra.mxu0 %v217
      %v442 = vpop.f32.mrf.mxu0
      %v443 = vadd.f32 0.0, %v442
      %444 = vmatmul.f32.gmra.mxu0 %v220
      %v445 = vpop.f32.mrf.mxu0
      %v446 = vadd.f32 0.0, %v445
      %447 = vmatmul.f32.gmra.mxu0 %v223
      %v448 = vpop.f32.mrf.mxu0
      %v449 = vadd.f32 0.0, %v448
      %450 = vmatmul.f32.gmra.mxu0 %v226
      %v451 = vpop.f32.mrf.mxu0
      %v452 = vadd.f32 0.0, %v451
      %453 = vmatmul.f32.gmra.mxu0 %v229
      %v454 = vpop.f32.mrf.mxu0
      %v455 = vadd.f32 0.0, %v454
      %456 = vmatmul.f32.gmra.mxu0 %v232
      %v457 = vpop.f32.mrf.mxu0
      %v458 = vadd.f32 0.0, %v457
      %459 = vmatmul.f32.gmra.mxu0 %v235
      %v460 = vpop.f32.mrf.mxu0
      %v461 = vadd.f32 0.0, %v460
      %462 = vmatmul.f32.gmra.mxu0 %v238
      %v463 = vpop.f32.mrf.mxu0
      %v464 = vadd.f32 0.0, %v463
      %465 = vmatmul.f32.gmra.mxu0 %v241
      %v466 = vpop.f32.mrf.mxu0
      %v467 = vadd.f32 0.0, %v466
      %468 = vmatmul.f32.gmra.mxu0 %v244
      %v469 = vpop.f32.mrf.mxu0
      %v470 = vadd.f32 0.0, %v469
      %471 = vmatmul.f32.gmra.mxu0 %v247
      %v472 = vpop.f32.mrf.mxu0
      %v473 = vadd.f32 0.0, %v472
      %474 = vmatmul.f32.gmra.mxu0 %v250
      %v475 = vpop.f32.mrf.mxu0
      %v476 = vadd.f32 0.0, %v475
      %477 = vmatmul.f32.gmra.mxu0 %v253
      %v478 = vpop.f32.mrf.mxu0
      %v479 = vadd.f32 0.0, %v478
      %480 = vmatmul.f32.gmra.mxu0 %v256
      %v481 = vpop.f32.mrf.mxu0
      %v482 = vadd.f32 0.0, %v481
      %483 = vmatmul.f32.gmra.mxu0 %v259
      %v484 = vpop.f32.mrf.mxu0
      %v485 = vadd.f32 0.0, %v484
      %486 = vmatmul.f32.gmra.mxu0 %v262
      %v487 = vpop.f32.mrf.mxu0
      %v488 = vadd.f32 0.0, %v487
      %489 = vmatmul.f32.gmra.mxu0 %v265
      %v490 = vpop.f32.mrf.mxu0
      %v491 = vadd.f32 0.0, %v490
      %492 = vmatmul.f32.gmra.mxu0 %v268
      %v493 = vpop.f32.mrf.mxu0
      %v494 = vadd.f32 0.0, %v493
      %495 = vmatmul.f32.gmra.mxu0 %v271
      %v496 = vpop.f32.mrf.mxu0
      %v497 = vadd.f32 0.0, %v496
      %498 = vmatmul.f32.gmra.mxu0 %v274
      %v499 = vpop.f32.mrf.mxu0
      %v500 = vadd.f32 0.0, %v499
      %501 = vmatmul.f32.gmra.mxu0 %v277
      %v502 = vpop.f32.mrf.mxu0
      %v503 = vadd.f32 0.0, %v502
      %504 = vmatmul.f32.gmra.mxu0 %v280
      %v505 = vpop.f32.mrf.mxu0
      %v506 = vadd.f32 0.0, %v505
      %507 = vdwg.mxu0
      %508 = vst [vmem:[%s147] sm:$0xff] %v300
      %509 = vst [vmem:[%s147 + $0x8] sm:$0xff] %v413
      %510 = vst [vmem:[%s147 + $0x10] sm:$0xff] %v303
      %511 = vst [vmem:[%s147 + $0x18] sm:$0xff] %v416
      %512 = vst [vmem:[%s147 + $0x20] sm:$0xff] %v306
      %513 = vst [vmem:[%s147 + $0x28] sm:$0xff] %v419
      %514 = vst [vmem:[%s147 + $0x30] sm:$0xff] %v309
      %515 = vst [vmem:[%s147 + $0x38] sm:$0xff] %v422
      %516 = vst [vmem:[%s147 + $0x40] sm:$0xff] %v312
      %517 = vst [vmem:[%s147 + $0x48] sm:$0xff] %v425
      %518 = vst [vmem:[%s147 + $0x50] sm:$0xff] %v315
      %519 = vst [vmem:[%s147 + $0x58] sm:$0xff] %v428
      %520 = vst [vmem:[%s147 + $0x60] sm:$0xff] %v318
      %521 = vst [vmem:[%s147 + $0x68] sm:$0xff] %v431
      %522 = vst [vmem:[%s147 + $0x70] sm:$0xff] %v321
      %523 = vst [vmem:[%s147 + $0x78] sm:$0xff] %v434
      %524 = vst [vmem:[%s147 + $0x80] sm:$0xff] %v324
      %525 = vst [vmem:[%s147 + $0x88] sm:$0xff] %v437
      %526 = vst [vmem:[%s147 + $0x90] sm:$0xff] %v327
      %527 = vst [vmem:[%s147 + $0x98] sm:$0xff] %v440
      %528 = vst [vmem:[%s147 + $0xa0] sm:$0xff] %v330
      %529 = vst [vmem:[%s147 + $0xa8] sm:$0xff] %v443
      %530 = vst [vmem:[%s147 + $0xb0] sm:$0xff] %v333
      %531 = vst [vmem:[%s147 + $0xb8] sm:$0xff] %v446
      %532 = vst [vmem:[%s147 + $0xc0] sm:$0xff] %v336
      %533 = vst [vmem:[%s147 + $0xc8] sm:$0xff] %v449
      %534 = vst [vmem:[%s147 + $0xd0] sm:$0xff] %v339
      %535 = vst [vmem:[%s147 + $0xd8] sm:$0xff] %v452
      %536 = vst [vmem:[%s147 + $0xe0] sm:$0xff] %v342
      %537 = vst [vmem:[%s147 + $0xe8] sm:$0xff] %v455
      %538 = vst [vmem:[%s147 + $0xf0] sm:$0xff] %v345
      %539 = vst [vmem:[%s147 + $0xf8] sm:$0xff] %v458
      %540 = vst [vmem:[%s147 + $0x100] sm:$0xff] %v348
      %541 = vst [vmem:[%s147 + $0x108] sm:$0xff] %v461
      %542 = vst [vmem:[%s147 + $0x110] sm:$0xff] %v351
      %543 = vst [vmem:[%s147 + $0x118] sm:$0xff] %v464
      %544 = vst [vmem:[%s147 + $0x120] sm:$0xff] %v354
      %545 = vst [vmem:[%s147 + $0x128] sm:$0xff] %v467
      %546 = vst [vmem:[%s147 + $0x130] sm:$0xff] %v357
      %547 = vst [vmem:[%s147 + $0x138] sm:$0xff] %v470
      %548 = vst [vmem:[%s147 + $0x140] sm:$0xff] %v360
      %549 = vst [vmem:[%s147 + $0x148] sm:$0xff] %v473
      %550 = vst [vmem:[%s147 + $0x150] sm:$0xff] %v363
      %551 = vst [vmem:[%s147 + $0x158] sm:$0xff] %v476
      %552 = vst [vmem:[%s147 + $0x160] sm:$0xff] %v366
      %553 = vst [vmem:[%s147 + $0x168] sm:$0xff] %v479
      %554 = vst [vmem:[%s147 + $0x170] sm:$0xff] %v369
      %555 = vst [vmem:[%s147 + $0x178] sm:$0xff] %v482
      %556 = vst [vmem:[%s147 + $0x180] sm:$0xff] %v372
      %557 = vst [vmem:[%s147 + $0x188] sm:$0xff] %v485
      %558 = vst [vmem:[%s147 + $0x190] sm:$0xff] %v375
      %559 = vst [vmem:[%s147 + $0x198] sm:$0xff] %v488
      %560 = vst [vmem:[%s147 + $0x1a0] sm:$0xff] %v378
      %561 = vst [vmem:[%s147 + $0x1a8] sm:$0xff] %v491
      %562 = vst [vmem:[%s147 + $0x1b0] sm:$0xff] %v381
      %563 = vst [vmem:[%s147 + $0x1b8] sm:$0xff] %v494
      %564 = vst [vmem:[%s147 + $0x1c0] sm:$0xff] %v384
      %565 = vst [vmem:[%s147 + $0x1c8] sm:$0xff] %v497
      %566 = vst [vmem:[%s147 + $0x1d0] sm:$0xff] %v387
      %567 = vst [vmem:[%s147 + $0x1d8] sm:$0xff] %v500
      %568 = vst [vmem:[%s147 + $0x1e0] sm:$0xff] %v390
      %569 = vst [vmem:[%s147 + $0x1e8] sm:$0xff] %v503
      %570 = vst [vmem:[%s147 + $0x1f0] sm:$0xff] %v393
      %571 = vst [vmem:[%s147 + $0x1f8] sm:$0xff] %v506
      %s572 = smul.u32 32, %s13
      %p573 = scmp.lt.s32.totalorder %s572, 63
      %s574 = scalar_select %p573, %s572, 63
      %s575 = smul.addr %s574, 2
      %s576 = smul.addr %s575, 8
      %s577 = scalar_lea.vmem %s2, %s576
      // Predicated region
      $region29: #{decoder_forward.6} parent=27 // pred_check
        %p578 = pneg %p78
      $region30: #{decoder_forward.6} parent=27 // pred_check_branch
        %580 = sbr.rel (%p578) target = $region32
      $region31: #{decoder_forward.6} parent=27 // pred_region
        %s581 = smul.u32 32, %s13
      $region32: #{decoder_forward.6} parent=27 // pred_fallthru
        _
    $region28: #{decoder_forward.6} parent=5 // pred_fallthru
      _
    %p582 = scmp.le.s32.totalorder 2, %s8
    // Predicated region
    $region33: #{decoder_forward.6} parent=5 // pred_check
      %p583 = pneg %p582
    $region34: #{decoder_forward.6} parent=5 // pred_check_branch
      %585 = sbr.rel (%p583) target = $region36
    $region35: #{decoder_forward.6} parent=5 // pred_region
      %s586 = ssub.s32 %s8, 2
      // Predicated region
      $region37: #{decoder_forward.6} parent=35 // pred_check
        %p587 = pneg %p84
      $region38: #{decoder_forward.6} parent=35 // pred_check_branch
        %589 = sbr.rel (%p587) target = $region40
      $region39: #{decoder_forward.6} parent=35 // pred_region
        %s590 = smul.u32 32, %s14
        %p591 = scmp.lt.s32.totalorder %s590, 63
        %s592 = scalar_select %p591, %s590, 63
        %s593 = smul.addr %s592, 2
        %s594 = smul.addr %s593, 8
        %s595 = scalar_lea.vmem %s2, %s594
      $region40: #{decoder_forward.6} parent=35 // pred_fallthru
        _
    $region36: #{decoder_forward.6} parent=5 // pred_fallthru
      _
  $region6: #{decoder_forward.6} parent=0 // loop_footer
    %s12 = sadd.s32 1, %s8
  $region7: #{decoder_forward.6} parent=0 // loop_footer_branch
    %7 = sbr.rel target = $region3
  $region8: #{decoder_forward.6} parent=0 // loop_exit
    _

// kernel: decoder_forward.7
$region0: #{decoder_forward.7}
  #allocation0 [shape = 'u32[]', space=smem, size = 0x4, offset = 0x4, fixed_abs, tag = 'smem constant byte address 0x4 - core index']
  #allocation1 [shape = 'u32[72,128]{1,0:T(1,128)}', space=vmem, size = 0x9000, scoped, tag = 'internal scratch']
  %s0 = inlined_call_operand.vmem [shape: f32[3,16], index: 0, kind: input, shape index: {}]
  %s1 = inlined_call_operand.vmem [shape: f32[16,2048], index: 1, kind: input, shape index: {}]
  %s2 = inlined_call_operand.vmem [shape: f32[3,1], index: 2, kind: input, shape index: {}]
  %s3 = inlined_call_operand.vmem [shape: f32[3,2048], index: 3, kind: output, shape index: {}]
  %s4 = sld [smem:[#allocation0]]
  $region68: #{decoder_forward.7} parent=0
    _
  %s6 = ssub.s32 1, %s4
  %s7 = scalar_select 0, %s6, %s4
  $region1: #{decoder_forward.7} parent=0
    #allocation2 [shape = 'u8[131072]{0}', space=vmem, size = 0x20000, scoped, tag = 'input window, operand 1']
    loop: start=0, step=1, limit=4
    $region2: #{decoder_forward.7} parent=1 // loop_pre_header
      _
    $region3: #{decoder_forward.7} parent=1 // loop_header
      %s9 = sphi 0, %s13
      %p10 = scmp.ge.s32.totalorder %s9, 4
      %s17 = sphi 0, %s17
      %s19 = sphi 0, %s17
      %s20 = sphi 0, %s19
      %s34 = sphi 0, %s20
      %s40 = sphi 0, %s42
      %s43 = sphi 0, %s40
      %s44 = sphi 0, %s43
      %s60 = sphi 0, %s44
      %s64 = sphi 0, %s64
      %s66 = sphi 0, %s64
      %s67 = sphi 0, %s66
      %s81 = sphi 0, %s67
      %s87 = sphi 0, %s89
      %s90 = sphi 0, %s87
      %s91 = sphi 0, %s90
      %s107 = sphi 0, %s91
    $region4: #{decoder_forward.7} parent=1 // loop_header_branch
      %12 = sbr.rel (%p10) target = $region8
    $region5: #{decoder_forward.7} parent=1 // loop_body
      %s14 = ssub.s32 %s9, 1
      %s15 = ssub.s32 %s9, 2
      %s16 = sadd.s32 %s9, 1
      %s18 = sadd.s32 %s17, 1
      %p21 = scmp.eq.s32.totalorder %s9, 1
      %p22 = scmp.ne.s32.totalorder %s17, %s19
      %p23 = scmp.eq.s32.totalorder %s9, 0
      %p24 = por %p22, %p23
      %p25 = scmp.ne.s32.totalorder %s17, %s19
      %p26 = scmp.eq.s32.totalorder %s14, 1
      %p27 = por %p25, %p26
      %p28 = scmp.ne.s32.totalorder %s19, %s20
      %p29 = scmp.eq.s32.totalorder %s14, 0
      %p30 = por %p28, %p29
      %p31 = scmp.ne.s32.totalorder %s19, %s20
      %p32 = scmp.eq.s32.totalorder %s15, 1
      %p33 = por %p31, %p32
      %p35 = scmp.ne.s32.totalorder %s20, %s34
      %p36 = scmp.eq.s32.totalorder %s15, 0
      %p37 = por %p35, %p36
      %s38 = ssub.s32 %s9, %s16
      %p39 = scmp.eq.s32.totalorder %s38, 0
      %s41 = sadd.s32 %s40, 1
      %s42 = scalar_select %p39, %s40, %s41
      %p45 = pneg %p39
      %p46 = scmp.eq.s32.totalorder %s9, 1
      %p47 = por %p45, %p46
      %p48 = scmp.ne.s32.totalorder %s40, %s43
      %p49 = scmp.eq.s32.totalorder %s9, 0
      %p50 = por %p48, %p49
      %p51 = scmp.ne.s32.totalorder %s40, %s43
      %p52 = scmp.eq.s32.totalorder %s14, 1
      %p53 = por %p51, %p52
      %p54 = scmp.ne.s32.totalorder %s43, %s44
      %p55 = scmp.eq.s32.totalorder %s14, 0
      %p56 = por %p54, %p55
      %p57 = scmp.ne.s32.totalorder %s43, %s44
      %p58 = scmp.eq.s32.totalorder %s15, 1
      %p59 = por %p57, %p58
      %p61 = scmp.ne.s32.totalorder %s44, %s60
      %p62 = scmp.eq.s32.totalorder %s15, 0
      %p63 = por %p61, %p62
      %s65 = sadd.s32 %s64, 1
      %p68 = scmp.eq.s32.totalorder %s9, 1
      %p69 = scmp.ne.s32.totalorder %s64, %s66
      %p70 = scmp.eq.s32.totalorder %s9, 0
      %p71 = por %p69, %p70
      %p72 = scmp.ne.s32.totalorder %s64, %s66
      %p73 = scmp.eq.s32.totalorder %s14, 1
      %p74 = por %p72, %p73
      %p75 = scmp.ne.s32.totalorder %s66, %s67
      %p76 = scmp.eq.s32.totalorder %s14, 0
      %p77 = por %p75, %p76
      %p78 = scmp.ne.s32.totalorder %s66, %s67
      %p79 = scmp.eq.s32.totalorder %s15, 1
      %p80 = por %p78, %p79
      %p82 = scmp.ne.s32.totalorder %s67, %s81
      %p83 = scmp.eq.s32.totalorder %s15, 0
      %p84 = por %p82, %p83
      %s85 = ssub.s32 %s9, %s16
      %p86 = scmp.eq.s32.totalorder %s85, 0
      %s88 = sadd.s32 %s87, 1
      %s89 = scalar_select %p86, %s87, %s88
      %p92 = pneg %p86
      %p93 = scmp.eq.s32.totalorder %s9, 1
      %p94 = por %p92, %p93
      %p95 = scmp.ne.s32.totalorder %s87, %s90
      %p96 = scmp.eq.s32.totalorder %s9, 0
      %p97 = por %p95, %p96
      %p98 = scmp.ne.s32.totalorder %s87, %s90
      %p99 = scmp.eq.s32.totalorder %s14, 1
      %p100 = por %p98, %p99
      %p101 = scmp.ne.s32.totalorder %s90, %s91
      %p102 = scmp.eq.s32.totalorder %s14, 0
      %p103 = por %p101, %p102
      %p104 = scmp.ne.s32.totalorder %s90, %s91
      %p105 = scmp.eq.s32.totalorder %s15, 1
      %p106 = por %p104, %p105
      %p108 = scmp.ne.s32.totalorder %s91, %s107
      %p109 = scmp.eq.s32.totalorder %s15, 0
      %p110 = por %p108, %p109
      %p111 = scmp.le.s32.totalorder 1, %s9
      %p112 = scmp.lt.s32.totalorder %s9, 3
      %p113 = pnand %p111, %p112
      %p114 = pneg %p113
      // Predicated region
      $region9: #{decoder_forward.7} parent=5 // pred_check
        _
      $region10: #{decoder_forward.7} parent=5 // pred_check_branch
        %116 = sbr.rel (%p113) target = $region12
      $region11: #{decoder_forward.7} parent=5 // pred_region
        %s117 = ssub.s32 %s9, 1
        // Predicated region
        $region13: #{decoder_forward.7} parent=11 // pred_check
          %p118 = pneg %p30
        $region14: #{decoder_forward.7} parent=11 // pred_check_branch
          %120 = sbr.rel (%p118) target = $region16
        $region15: #{decoder_forward.7} parent=11 // pred_region
          _
        $region16: #{decoder_forward.7} parent=11 // pred_fallthru
          _
        // Predicated region
        $region17: #{decoder_forward.7} parent=11 // pred_check
          %p121 = pneg %p77
        $region18: #{decoder_forward.7} parent=11 // pred_check_branch
          %123 = sbr.rel (%p121) target = $region20
        $region19: #{decoder_forward.7} parent=11 // pred_region
          _
        $region20: #{decoder_forward.7} parent=11 // pred_fallthru
          _
      $region12: #{decoder_forward.7} parent=5 // pred_fallthru
        _
      %p124 = scmp.lt.s32.totalorder %s9, 2
      // Predicated region
      $region21: #{decoder_forward.7} parent=5 // pred_check
        %p125 = pneg %p124
      $region22: #{decoder_forward.7} parent=5 // pred_check_branch
        %127 = sbr.rel (%p125) target = $region24
      $region23: #{decoder_forward.7} parent=5 // pred_region
        // Predicated region
        $region25: #{decoder_forward.7} parent=23 // pred_check
          %p128 = pneg %p50
        $region26: #{decoder_forward.7} parent=23 // pred_check_branch
          %130 = sbr.rel (%p128) target = $region28
        $region27: #{decoder_forward.7} parent=23 // pred_region
          %s131 = sand.u32 %s40, 1
          %s132 = sand.u32 %s40, 1
          %s133 = smul.addr %s132, 128
          %s134 = scalar_lea.vmem [#allocation2], %s133
          %s135 = smul.u32 8, %s9
          %s136 = smul.addr %s135, 8
          %s137 = scalar_lea.vmem %s1, %s136
          // Predicated region
          $region29: #{decoder_forward.7} parent=27 // pred_check
            _
          $region30: #{decoder_forward.7} parent=27 // pred_check_branch
            %139 = sbr.rel (0) target = $region32
          $region31: #{decoder_forward.7} parent=27 // pred_region
            // Predicated region
            $region33: #{decoder_forward.7} parent=31 // pred_check
              _
            $region34: #{decoder_forward.7} parent=31 // pred_check_branch
              %141 = sbr.rel (0) target = $region36
            $region35: #{decoder_forward.7} parent=31 // pred_region
              loop: start=0, step=1, limit=1
              $region37: #{decoder_forward.7} parent=35 // loop_pre_header
                _
              $region38: #{decoder_forward.7} parent=35 // loop_header
                %s143 = sphi 0, %s147
                %p144 = scmp.ge.s32.totalorder %s143, 1
                %s148 = sphi %s137, %s137
                %s149 = sphi %s134, %s134
              $region39: #{decoder_forward.7} parent=35 // loop_header_branch
                %146 = sbr.rel (%p144) target = $region43
              $region40: #{decoder_forward.7} parent=35 // loop_body
                %v150 = vld [vmem:[%s148] sm:$0xff]
                %151 = vst [vmem:[%s149] sm:$0xff] %v150
                %v152 = vld [vmem:[%s148 + $0x8] sm:$0xff]
                %153 = vst [vmem:[%s149 + $0x8] sm:$0xff] %v152
                %v154 = vld [vmem:[%s148 + $0x10] sm:$0xff]
                %155 = vst [vmem:[%s149 + $0x10] sm:$0xff] %v154
                %v156 = vld [vmem:[%s148 + $0x18] sm:$0xff]
                %157 = vst [vmem:[%s149 + $0x18] sm:$0xff] %v156
                %v158 = vld [vmem:[%s148 + $0x20] sm:$0xff]
                %159 = vst [vmem:[%s149 + $0x20] sm:$0xff] %v158
                %v160 = vld [vmem:[%s148 + $0x28] sm:$0xff]
                %161 = vst [vmem:[%s149 + $0x28] sm:$0xff] %v160
                %v162 = vld [vmem:[%s148 + $0x30] sm:$0xff]
                %163 = vst [vmem:[%s149 + $0x30] sm:$0xff] %v162
                %v164 = vld [vmem:[%s148 + $0x38] sm:$0xff]
                %165 = vst [vmem:[%s149 + $0x38] sm:$0xff] %v164
                %v166 = vld [vmem:[%s148 + $0x80] sm:$0xff]
                %167 = vst [vmem:[%s149 + $0x40] sm:$0xff] %v166
                %v168 = vld [vmem:[%s148 + $0x88] sm:$0xff]
                %169 = vst [vmem:[%s149 + $0x48] sm:$0xff] %v168
                %v170 = vld [vmem:[%s148 + $0x90] sm:$0xff]
                %171 = vst [vmem:[%s149 + $0x50] sm:$0xff] %v170
                %v172 = vld [vmem:[%s148 + $0x98] sm:$0xff]
                %173 = vst [vmem:[%s149 + $0x58] sm:$0xff] %v172
                %v174 = vld [vmem:[%s148 + $0xa0] sm:$0xff]
                %175 = vst [vmem:[%s149 + $0x60] sm:$0xff] %v174
                %v176 = vld [vmem:[%s148 + $0xa8] sm:$0xff]
                %177 = vst [vmem:[%s149 + $0x68] sm:$0xff] %v176
                %v178 = vld [vmem:[%s148 + $0xb0] sm:$0xff]
                %179 = vst [vmem:[%s149 + $0x70] sm:$0xff] %v178
                %v180 = vld [vmem:[%s148 + $0xb8] sm:$0xff]
                %181 = vst [vmem:[%s149 + $0x78] sm:$0xff] %v180
              $region41: #{decoder_forward.7} parent=35 // loop_footer
                %s147 = sadd.s32 1, %s143
              $region42: #{decoder_forward.7} parent=35 // loop_footer_branch
                %142 = sbr.rel target = $region38
              $region43: #{decoder_forward.7} parent=35 // loop_exit
                _
            $region36: #{decoder_forward.7} parent=31 // pred_fallthru
              _
            // Predicated region
            $region44: #{decoder_forward.7} parent=31 // pred_check
              _
            $region45: #{decoder_forward.7} parent=31 // pred_check_branch
              %183 = sbr.rel target = $region47
            $region46: #{decoder_forward.7} parent=31 // pred_region
              _
            $region47: #{decoder_forward.7} parent=31 // pred_fallthru
              _
          $region32: #{decoder_forward.7} parent=27 // pred_fallthru
            _
          %184 = vnop
        $region28: #{decoder_forward.7} parent=23 // pred_fallthru
          _
      $region24: #{decoder_forward.7} parent=5 // pred_fallthru
        _
      %p185 = scmp.le.s32.totalorder 1, %s9
      %p186 = scmp.lt.s32.totalorder %s9, 3
      %p187 = pnand %p185, %p186
      %p188 = pneg %p187
      // Predicated region
      $region48: #{decoder_forward.7} parent=5 // pred_check
        _
      $region49: #{decoder_forward.7} parent=5 // pred_check_branch
        %190 = sbr.rel (%p187) target = $region51
      $region50: #{decoder_forward.7} parent=5 // pred_region
        %s191 = ssub.s32 %s9, 1
        %s192 = sand.u32 %s43, 1
        %s193 = sand.u32 %s43, 1
        %s194 = smul.addr %s193, 128
        %s195 = scalar_lea.vmem [#allocation2], %s194
        // Predicated region
        $region52: #{decoder_forward.7} parent=50 // pred_check
          %p196 = pneg %p56
        $region53: #{decoder_forward.7} parent=50 // pred_check_branch
          %198 = sbr.rel (%p196) target = $region55
        $region54: #{decoder_forward.7} parent=50 // pred_region
          _
        $region55: #{decoder_forward.7} parent=50 // pred_fallthru
          _
        %p199 = pneg %p30
        %p200 = pneg %p27
        %s201 = sand.u32 %s43, 1
        %s202 = sand.u32 %s43, 1
        %s203 = smul.addr %s202, 128
        %s204 = scalar_lea.vmem [#allocation2], %s203
        %p205 = pneg %p56
        %p206 = pneg %p53
        %p207 = pneg %p77
        %p208 = pneg %p74
        %p209 = pneg %p103
        %p210 = pneg %p100
        %s211 = smul.u32 8, %s14
        %p212 = scmp.lt.s32.totalorder %s211, 15
        %s213 = scalar_select %p212, %s211, 15
        %s214 = smul.addr %s213, 4
        %s215 = scalar_lea.vmem %s3, %s214
        %s216 = smul.u32 8, %s14
        %s217 = smul.u32 8, %s14
        %p218 = scmp.lt.s32.totalorder %s217, 15
        %s219 = scalar_select %p218, %s217, 15
        %s220 = smul.addr %s219, 4
        %s221 = scalar_lea.vmem %s3, %s220
        %s222 = smul.u32 8, %s14
        %v223 = vld [vmem:[%s0] sm:$0x7]
        %v224 = vld [vmem:[%s195] sm:$0xff]
        %v225 = vld [vmem:[%s195 + $0x8] sm:$0xff]
        %v226 = vld [vmem:[%s195 + $0x10] sm:$0xff]
        %v227 = vld [vmem:[%s195 + $0x18] sm:$0xff]
        %v228 = vld [vmem:[%s195 + $0x20] sm:$0xff]
        %v229 = vld [vmem:[%s195 + $0x28] sm:$0xff]
        %v230 = vld [vmem:[%s195 + $0x30] sm:$0xff]
        %v231 = vld [vmem:[%s195 + $0x38] sm:$0xff]
        %v232 = vld [vmem:[%s195 + $0x40] sm:$0xff]
        %v233 = vld [vmem:[%s195 + $0x48] sm:$0xff]
        %v234 = vld [vmem:[%s195 + $0x50] sm:$0xff]
        %v235 = vld [vmem:[%s195 + $0x58] sm:$0xff]
        %v236 = vld [vmem:[%s195 + $0x60] sm:$0xff]
        %v237 = vld [vmem:[%s195 + $0x68] sm:$0xff]
        %v238 = vld [vmem:[%s195 + $0x70] sm:$0xff]
        %v239 = vld [vmem:[%s195 + $0x78] sm:$0xff]
        %v240 = vld [vmem:[%s2] sm:$0x7]
        %242 = vset.pattern.permute.xlu0 0
        %243 = vperm.xlu0 %242, %v240
        %v244 = vpop.permute.xlu0 %243
        %vm246 = vcmask 130048
        %v248 = vsel %vm246, %v223, 0
        %250 = vmatpush.msra.mxu0 0.0
        %251 = vmatpush.msra.mxu0 0.0
        %252 = vmatpush.msra.mxu0 0.0
        %253 = vmatpush.msra.mxu0 0.0
        %254 = vmatpush.msra.mxu0 0.0
        %255 = vmatpush.msra.mxu0 0.0
        %256 = vmatpush.msra.mxu0 0.0
        %257 = vmatpush.msra.mxu0 0.0
        %258 = vmatpush.msra.mxu0 0.0
        %259 = vmatpush.msra.mxu0 0.0
        %260 = vmatpush.msra.mxu0 0.0
        %261 = vmatpush.msra.mxu0 0.0
        %262 = vmatpush.msra.mxu0 0.0
        %263 = vmatpush.msra.mxu0 0.0
        %264 = vmatpush.msra.mxu0 %v232
        %265 = vmatpush.msra.mxu0 %v224
        %266 = vmatmul.f32.gmra.mxu0 %v248
        %v267 = vpop.f32.mrf.mxu0
        %v268 = vadd.f32 %v244, %v267
        %269 = vdwg.mxu0
        %270 = vmatpush.msra.mxu0 0.0
        %271 = vmatpush.msra.mxu0 0.0
        %272 = vmatpush.msra.mxu0 0.0
        %273 = vmatpush.msra.mxu0 0.0
        %274 = vmatpush.msra.mxu0 0.0
        %275 = vmatpush.msra.mxu0 0.0
        %276 = vmatpush.msra.mxu0 0.0
        %277 = vmatpush.msra.mxu0 0.0
        %278 = vmatpush.msra.mxu0 0.0
        %279 = vmatpush.msra.mxu0 0.0
        %280 = vmatpush.msra.mxu0 0.0
        %281 = vmatpush.msra.mxu0 0.0
        %282 = vmatpush.msra.mxu0 0.0
        %283 = vmatpush.msra.mxu0 0.0
        %284 = vmatpush.msra.mxu0 %v233
        %285 = vmatpush.msra.mxu0 %v225
        %286 = vmatmul.f32.gmra.mxu0 %v248
        %v287 = vpop.f32.mrf.mxu0
        %v288 = vadd.f32 %v244, %v287
        %289 = vdwg.mxu0
        %290 = vmatpush.msra.mxu0 0.0
        %291 = vmatpush.msra.mxu0 0.0
        %292 = vmatpush.msra.mxu0 0.0
        %293 = vmatpush.msra.mxu0 0.0
        %294 = vmatpush.msra.mxu0 0.0
        %295 = vmatpush.msra.mxu0 0.0
        %296 = vmatpush.msra.mxu0 0.0
        %297 = vmatpush.msra.mxu0 0.0
        %298 = vmatpush.msra.mxu0 0.0
        %299 = vmatpush.msra.mxu0 0.0
        %300 = vmatpush.msra.mxu0 0.0
        %301 = vmatpush.msra.mxu0 0.0
        %302 = vmatpush.msra.mxu0 0.0
        %303 = vmatpush.msra.mxu0 0.0
        %304 = vmatpush.msra.mxu0 %v234
        %305 = vmatpush.msra.mxu0 %v226
        %306 = vmatmul.f32.gmra.mxu0 %v248
        %v307 = vpop.f32.mrf.mxu0
        %v308 = vadd.f32 %v244, %v307
        %309 = vdwg.mxu0
        %310 = vmatpush.msra.mxu0 0.0
        %311 = vmatpush.msra.mxu0 0.0
        %312 = vmatpush.msra.mxu0 0.0
        %313 = vmatpush.msra.mxu0 0.0
        %314 = vmatpush.msra.mxu0 0.0
        %315 = vmatpush.msra.mxu0 0.0
        %316 = vmatpush.msra.mxu0 0.0
        %317 = vmatpush.msra.mxu0 0.0
        %318 = vmatpush.msra.mxu0 0.0
        %319 = vmatpush.msra.mxu0 0.0
        %320 = vmatpush.msra.mxu0 0.0
        %321 = vmatpush.msra.mxu0 0.0
        %322 = vmatpush.msra.mxu0 0.0
        %323 = vmatpush.msra.mxu0 0.0
        %324 = vmatpush.msra.mxu0 %v235
        %325 = vmatpush.msra.mxu0 %v227
        %326 = vmatmul.f32.gmra.mxu0 %v248
        %v327 = vpop.f32.mrf.mxu0
        %v328 = vadd.f32 %v244, %v327
        %329 = vdwg.mxu0
        %330 = vmatpush.msra.mxu0 0.0
        %331 = vmatpush.msra.mxu0 0.0
        %332 = vmatpush.msra.mxu0 0.0
        %333 = vmatpush.msra.mxu0 0.0
        %334 = vmatpush.msra.mxu0 0.0
        %335 = vmatpush.msra.mxu0 0.0
        %336 = vmatpush.msra.mxu0 0.0
        %337 = vmatpush.msra.mxu0 0.0
        %338 = vmatpush.msra.mxu0 0.0
        %339 = vmatpush.msra.mxu0 0.0
        %340 = vmatpush.msra.mxu0 0.0
        %341 = vmatpush.msra.mxu0 0.0
        %342 = vmatpush.msra.mxu0 0.0
        %343 = vmatpush.msra.mxu0 0.0
        %344 = vmatpush.msra.mxu0 %v236
        %345 = vmatpush.msra.mxu0 %v228
        %346 = vmatmul.f32.gmra.mxu0 %v248
        %v347 = vpop.f32.mrf.mxu0
        %v348 = vadd.f32 %v244, %v347
        %349 = vdwg.mxu0
        %350 = vmatpush.msra.mxu0 0.0
        %351 = vmatpush.msra.mxu0 0.0
        %352 = vmatpush.msra.mxu0 0.0
        %353 = vmatpush.msra.mxu0 0.0
        %354 = vmatpush.msra.mxu0 0.0
        %355 = vmatpush.msra.mxu0 0.0
        %356 = vmatpush.msra.mxu0 0.0
        %357 = vmatpush.msra.mxu0 0.0
        %358 = vmatpush.msra.mxu0 0.0
        %359 = vmatpush.msra.mxu0 0.0
        %360 = vmatpush.msra.mxu0 0.0
        %361 = vmatpush.msra.mxu0 0.0
        %362 = vmatpush.msra.mxu0 0.0
        %363 = vmatpush.msra.mxu0 0.0
        %364 = vmatpush.msra.mxu0 %v237
        %365 = vmatpush.msra.mxu0 %v229
        %366 = vmatmul.f32.gmra.mxu0 %v248
        %v367 = vpop.f32.mrf.mxu0
        %v368 = vadd.f32 %v244, %v367
        %369 = vdwg.mxu0
        %370 = vmatpush.msra.mxu0 0.0
        %371 = vmatpush.msra.mxu0 0.0
        %372 = vmatpush.msra.mxu0 0.0
        %373 = vmatpush.msra.mxu0 0.0
        %374 = vmatpush.msra.mxu0 0.0
        %375 = vmatpush.msra.mxu0 0.0
        %376 = vmatpush.msra.mxu0 0.0
        %377 = vmatpush.msra.mxu0 0.0
        %378 = vmatpush.msra.mxu0 0.0
        %379 = vmatpush.msra.mxu0 0.0
        %380 = vmatpush.msra.mxu0 0.0
        %381 = vmatpush.msra.mxu0 0.0
        %382 = vmatpush.msra.mxu0 0.0
        %383 = vmatpush.msra.mxu0 0.0
        %384 = vmatpush.msra.mxu0 %v238
        %385 = vmatpush.msra.mxu0 %v230
        %386 = vmatmul.f32.gmra.mxu0 %v248
        %v387 = vpop.f32.mrf.mxu0
        %v388 = vadd.f32 %v244, %v387
        %389 = vdwg.mxu0
        %390 = vmatpush.msra.mxu0 0.0
        %391 = vmatpush.msra.mxu0 0.0
        %392 = vmatpush.msra.mxu0 0.0
        %393 = vmatpush.msra.mxu0 0.0
        %394 = vmatpush.msra.mxu0 0.0
        %395 = vmatpush.msra.mxu0 0.0
        %396 = vmatpush.msra.mxu0 0.0
        %397 = vmatpush.msra.mxu0 0.0
        %398 = vmatpush.msra.mxu0 0.0
        %399 = vmatpush.msra.mxu0 0.0
        %400 = vmatpush.msra.mxu0 0.0
        %401 = vmatpush.msra.mxu0 0.0
        %402 = vmatpush.msra.mxu0 0.0
        %403 = vmatpush.msra.mxu0 0.0
        %404 = vmatpush.msra.mxu0 %v239
        %405 = vmatpush.msra.mxu0 %v231
        %406 = vmatmul.f32.gmra.mxu0 %v248
        %v407 = vpop.f32.mrf.mxu0
        %v408 = vadd.f32 %v244, %v407
        %409 = vdwg.mxu0
        %v418 = vrot.slane %v288, 4
        %v419 = vrot.slane %v328, 4
        %v420 = vrot.slane %v368, 4
        %v421 = vrot.slane %v408, 4
        %vm422 = vcmask 1043456
        %v423 = vsel %vm422, %v268, %v418
        %v424 = vsel %vm422, %v308, %v419
        %v425 = vsel %vm422, %v348, %v420
        %v426 = vsel %vm422, %v388, %v421
        %431 = vst [vmem:[%s221] sm:$0x77] %v423
        %432 = vst [vmem:[%s221 + $0x8] sm:$0x77] %v424
        %433 = vst [vmem:[%s221 + $0x10] sm:$0x77] %v425
        %434 = vst [vmem:[%s221 + $0x18] sm:$0x77] %v426
        %s435 = smul.u32 8, %s14
        %p436 = scmp.lt.s32.totalorder %s435, 15
        %s437 = scalar_select %p436, %s435, 15
        %s438 = smul.addr %s437, 4
        %s439 = scalar_lea.vmem %s3, %s438
        // Predicated region
        $region56: #{decoder_forward.7} parent=50 // pred_check
          %p440 = pneg %p100
        $region57: #{decoder_forward.7} parent=50 // pred_check_branch
          %442 = sbr.rel (%p440) target = $region59
        $region58: #{decoder_forward.7} parent=50 // pred_region
          %s443 = smul.u32 8, %s14
        $region59: #{decoder_forward.7} parent=50 // pred_fallthru
          _
      $region51: #{decoder_forward.7} parent=5 // pred_fallthru
        _
      %p444 = scmp.le.s32.totalorder 2, %s9
      // Predicated region
      $region60: #{decoder_forward.7} parent=5 // pred_check
        %p445 = pneg %p444
      $region61: #{decoder_forward.7} parent=5 // pred_check_branch
        %447 = sbr.rel (%p445) target = $region63
      $region62: #{decoder_forward.7} parent=5 // pred_region
        %s448 = ssub.s32 %s9, 2
        // Predicated region
        $region64: #{decoder_forward.7} parent=62 // pred_check
          %p449 = pneg %p106
        $region65: #{decoder_forward.7} parent=62 // pred_check_branch
          %451 = sbr.rel (%p449) target = $region67
        $region66: #{decoder_forward.7} parent=62 // pred_region
          %s452 = smul.u32 8, %s15
          %p453 = scmp.lt.s32.totalorder %s452, 15
          %s454 = scalar_select %p453, %s452, 15
          %s455 = smul.addr %s454, 4
          %s456 = scalar_lea.vmem %s3, %s455
        $region67: #{decoder_forward.7} parent=62 // pred_fallthru
          _
      $region63: #{decoder_forward.7} parent=5 // pred_fallthru
        _
    $region6: #{decoder_forward.7} parent=1 // loop_footer
      %s13 = sadd.s32 1, %s9
    $region7: #{decoder_forward.7} parent=1 // loop_footer_branch
      %8 = sbr.rel target = $region3
    $region8: #{decoder_forward.7} parent=1 // loop_exit
      _

</llo_original>
